<compile_context>
chip_gen: v5e
topology: v5e:2x2
jax: 0.10.0
libtpu: 0.0.40
codegen_flags: <defaults>
</compile_context>

<pallas_src>
import jax
import jax.numpy as jnp
import numpy as np
from jax.experimental import pallas as pl
from jax.experimental.pallas import tpu as pltpu


def _round_up(x, m):
    return ((x + m - 1) // m) * m


# ---------------------------------------------------------------------------
# Fused kernel: all GRU layers + l_mu head in one pallas_call.
# Gate order follows PyTorch: [r | z | n] stacked along the 3*H axis.
# All sequence-shaped tensors are time-major 2-D: row index = t*B + b.
# ---------------------------------------------------------------------------
def make_prior_kernel(n_layers, n_hidden, batch_pad, seq):
    H = n_hidden
    B = batch_pad
    S = seq

    def kernel(*refs):
        x_ref, h0_ref = refs[0], refs[1]
        w_refs = refs[2:2 + 4 * n_layers]
        wmu_ref = refs[2 + 4 * n_layers]
        bmu_ref = refs[3 + 4 * n_layers]
        pmu_ref = refs[4 + 4 * n_layers]
        hout_ref = refs[5 + 4 * n_layers]
        seq_scr = refs[6 + 4 * n_layers]          # VMEM (S*B, H), time-major

        x = x_ref[...]                            # (S*B, Din): current layer input

        for layer in range(n_layers):
            w_ih = w_refs[4 * layer][...]         # (Din, 3H)
            w_hh = w_refs[4 * layer + 1][...]     # (H, 3H)
            b_gi = w_refs[4 * layer + 2][...]     # (1, 3H) = b_ih + [b_hr | b_hz | 0]
            b_hn = w_refs[4 * layer + 3][...]     # (1, H)  = n-gate third of b_hh

            # Hoisted input projection + folded biases: one MXU matmul over all
            # time steps, time-major so per-step reads are contiguous slabs.
            gi = jnp.dot(x, w_ih, preferred_element_type=jnp.float32) + b_gi

            # Hoisted broadcast of the n-gate hidden bias (once per layer, not per step).
            b_n = jnp.broadcast_to(b_hn, (B, H))

            h = h0_ref[layer]                     # (B, H)
            # Serial recurrence, fully unrolled (S small & static): only the
            # hidden-state matmul + gate math on the critical path.
            for t in range(S):
                gi_t = gi[t * B:(t + 1) * B, :]   # contiguous, sublane-aligned slab
                gh = jnp.dot(h, w_hh, preferred_element_type=jnp.float32)
                r = jax.nn.sigmoid(gi_t[:, 0:H] + gh[:, 0:H])
                u = jax.nn.sigmoid(gi_t[:, H:2 * H] + gh[:, H:2 * H])
                n = jnp.tanh(gi_t[:, 2 * H:] + r * (gh[:, 2 * H:] + b_n))
                h = (1.0 - u) * n + u * h
                seq_scr[t * B:(t + 1) * B, :] = h  # dense, aligned store
            hout_ref[layer] = h                   # final hidden state, written once
            x = seq_scr[...]                      # (S*B, H): next layer / head input

        # l_mu head fused in: one matmul over the whole (S*B, H) slab; the
        # output last dim is padded to 128 lanes -> unmasked store.
        mu = jnp.dot(x, wmu_ref[...], preferred_element_type=jnp.float32) + bmu_ref[...]
        pmu_ref[...] = mu

    return kernel


def prior_forward(params, z, h):
    """z: (B, S, n_latent) batch-first, h: (n_layers, B, n_hidden) ->
       (p_mu (B, S, n_latent), p_lv (n_latent,), h (n_layers, B, n_hidden))."""
    B, S, Din = z.shape
    n_layers = len(params["gru"])
    H = params["gru"][0][1].shape[0]              # w_hh is (H, 3H)
    n_out = params["w_mu"].shape[1]

    Bp = _round_up(max(B, 8), 8)                  # sublane-pad batch (f32 tile = 8 rows)
    n_out_p = _round_up(n_out, 128)               # lane-pad head output to 128

    # Wrapper-side layout plumbing: time-major, batch-padded, flattened to 2-D.
    x_tm = jnp.transpose(z.astype(jnp.float32), (1, 0, 2))        # (S, B, Din)
    x_tm = jnp.pad(x_tm, ((0, 0), (0, Bp - B), (0, 0)))
    x_tm = x_tm.reshape(S * Bp, Din)

    h_p = jnp.pad(h.astype(jnp.float32), ((0, 0), (0, Bp - B), (0, 0)))

    flat_w = []
    for (w_ih, w_hh, b_ih, b_hh) in params["gru"]:
        # Fold the r/z thirds of b_hh into the precomputed gi bias (they are not
        # multiplied by r); keep only the n-gate third on the serial path.
        b_gi = b_ih + jnp.concatenate(
            [b_hh[:, :2 * H], jnp.zeros((1, H), jnp.float32)], axis=-1)
        b_hn = b_hh[:, 2 * H:]
        flat_w += [w_ih, w_hh, b_gi, b_hn]

    # Lane-dense head: zero-pad n_out -> multiple of 128.
    w_mu_p = jnp.pad(params["w_mu"], ((0, 0), (0, n_out_p - n_out)))
    b_mu_p = jnp.pad(params["b_mu"], ((0, 0), (0, n_out_p - n_out)))

    p_flat, h_out_p = pl.pallas_call(
        make_prior_kernel(n_layers, H, Bp, S),
        out_shape=(
            jax.ShapeDtypeStruct((S * Bp, n_out_p), jnp.float32),
            jax.ShapeDtypeStruct((n_layers, Bp, H), jnp.float32),
        ),
        scratch_shapes=[pltpu.VMEM((S * Bp, H), jnp.float32)],
        input_output_aliases={1: 1},              # h_in aliases h_out (same shape/dtype)
    )(x_tm, h_p, *flat_w, w_mu_p, b_mu_p)

    # Unpad / back to batch-first (wrapper-side, not kernel work).
    p_mu = jnp.transpose(
        p_flat[:, :n_out].reshape(S, Bp, n_out)[:, :B, :], (1, 0, 2))
    h_out = h_out_p[:, :B, :]
    return p_mu, params["p_lv"], h_out


# ---------------------------------------------------------------------------
# Parameter construction (deterministic, synthetic).
# ---------------------------------------------------------------------------
def init_prior_params(key, n_latent, n_hidden, n_layers):
    params = {"gru": [], "p_lv": jnp.zeros((n_latent,), jnp.float32)}
    for layer in range(n_layers):
        din = n_latent if layer == 0 else n_hidden
        key, k1, k2 = jax.random.split(key, 3)
        # xavier_normal_ on PyTorch weight [3H, din] -> stored transposed (din, 3H)
        std_ih = float(np.sqrt(2.0 / (din + 3 * n_hidden)))
        std_hh = float(np.sqrt(2.0 / (n_hidden + 3 * n_hidden)))
        w_ih = std_ih * jax.random.normal(k1, (din, 3 * n_hidden), jnp.float32)
        w_hh = std_hh * jax.random.normal(k2, (n_hidden, 3 * n_hidden), jnp.float32)
        b_ih = jnp.zeros((1, 3 * n_hidden), jnp.float32)
        b_hh = jnp.zeros((1, 3 * n_hidden), jnp.float32)
        params["gru"].append((w_ih, w_hh, b_ih, b_hh))
    # xavier_uniform_ on l_mu.weight [n_out, n_hidden] -> stored transposed (n_hidden, n_out)
    key, k3 = jax.random.split(key)
    limit = float(np.sqrt(6.0 / (n_hidden + n_latent)))
    params["w_mu"] = jax.random.uniform(k3, (n_hidden, n_latent), jnp.float32,
                                        minval=-limit, maxval=limit)
    params["b_mu"] = jnp.zeros((1, n_latent), jnp.float32)
    return params


# ---------------------------------------------------------------------------
# Pure-JAX reference (for correctness check only).
# ---------------------------------------------------------------------------
def _gru_layer_ref(x_seq, h0, w_ih, w_hh, b_ih, b_hh):
    H = h0.shape[-1]

    def step(h, x):
        gi = x @ w_ih + b_ih
        gh = h @ w_hh + b_hh
        r = jax.nn.sigmoid(gi[:, :H] + gh[:, :H])
        u = jax.nn.sigmoid(gi[:, H:2 * H] + gh[:, H:2 * H])
        n = jnp.tanh(gi[:, 2 * H:] + r * gh[:, 2 * H:])
        h_new = (1.0 - u) * n + u * h
        return h_new, h_new

    h_fin, outs = jax.lax.scan(step, h0, x_seq)
    return outs, h_fin


def prior_forward_ref(params, z, h):
    x = jnp.transpose(z, (1, 0, 2)).astype(jnp.float32)   # time-major for scan
    h_finals = []
    for layer, (w_ih, w_hh, b_ih, b_hh) in enumerate(params["gru"]):
        x, h_fin = _gru_layer_ref(x, h[layer], w_ih, w_hh, b_ih, b_hh)
        h_finals.append(h_fin)
    h_out = jnp.stack(h_finals, axis=0)
    p_mu = jnp.einsum("sbh,ho->sbo", x, params["w_mu"]) + params["b_mu"][0]
    return jnp.transpose(p_mu, (1, 0, 2)), params["p_lv"], h_out


# ---------------------------------------------------------------------------
if __name__ == "__main__":
    # Small, forward-consistent shapes.
    batch, seq = 2, 8
    n_latent, n_hidden, n_layers = 4, 32, 2

    key = jax.random.PRNGKey(0)
    kp, kz = jax.random.split(key)
    params = init_prior_params(kp, n_latent, n_hidden, n_layers)

    z = jax.random.normal(kz, (batch, seq, n_latent), jnp.float32)
    h0 = jnp.zeros((n_layers, batch, n_hidden), jnp.float32)   # init_hidden equivalent

    p_mu, p_lv, h_out = prior_forward(params, z, h0)
    jax.block_until_ready((p_mu, p_lv, h_out))

    # Correctness check vs pure-JAX reference.
    p_mu_r, p_lv_r, h_out_r = prior_forward_ref(params, z, h0)
    np.testing.assert_allclose(np.asarray(p_mu), np.asarray(p_mu_r), rtol=1e-5, atol=1e-5)
    np.testing.assert_allclose(np.asarray(h_out), np.asarray(h_out_r), rtol=1e-5, atol=1e-5)
    np.testing.assert_allclose(np.asarray(p_lv), np.asarray(p_lv_r), rtol=0, atol=0)

    assert p_mu.shape == (batch, seq, n_latent)
    assert p_lv.shape == (n_latent,)
    assert h_out.shape == (n_layers, batch, n_hidden)

    print("KERNEL_OK")
</pallas_src>

<mosaic_0001>
module attributes {stable_mosaic.version = 11 : i64} {
  func.func @kernel(%arg0: memref<64x4xf32, #tpu.memory_space<vmem>>, %arg1: memref<2x8x32xf32, #tpu.memory_space<vmem>>, %arg2: memref<4x96xf32, #tpu.memory_space<vmem>>, %arg3: memref<32x96xf32, #tpu.memory_space<vmem>>, %arg4: memref<1x96xf32, #tpu.memory_space<vmem>>, %arg5: memref<1x32xf32, #tpu.memory_space<vmem>>, %arg6: memref<32x96xf32, #tpu.memory_space<vmem>>, %arg7: memref<32x96xf32, #tpu.memory_space<vmem>>, %arg8: memref<1x96xf32, #tpu.memory_space<vmem>>, %arg9: memref<1x32xf32, #tpu.memory_space<vmem>>, %arg10: memref<32x128xf32, #tpu.memory_space<vmem>>, %arg11: memref<1x128xf32, #tpu.memory_space<vmem>>, %arg12: memref<64x128xf32, #tpu.memory_space<vmem>>, %arg13: memref<2x8x32xf32, #tpu.memory_space<vmem>>, %arg14: memref<64x32xf32, #tpu.memory_space<vmem>>) attributes {dimension_semantics = [], scalar_prefetch = 0 : i64, scratch_operands = 1 : i64, tpu.core_type = #tpu.core_type<tc>} {
    %c0 = arith.constant 0 : index
    %c0_0 = arith.constant 0 : index
    %0 = vector.load %arg0[%c0, %c0_0] : memref<64x4xf32, #tpu.memory_space<vmem>>, vector<64x4xf32>
    %c0_1 = arith.constant 0 : index
    %c0_2 = arith.constant 0 : index
    %1 = vector.load %arg2[%c0_1, %c0_2] : memref<4x96xf32, #tpu.memory_space<vmem>>, vector<4x96xf32>
    %c0_3 = arith.constant 0 : index
    %c0_4 = arith.constant 0 : index
    %2 = vector.load %arg3[%c0_3, %c0_4] : memref<32x96xf32, #tpu.memory_space<vmem>>, vector<32x96xf32>
    %c0_5 = arith.constant 0 : index
    %c0_6 = arith.constant 0 : index
    %3 = vector.load %arg4[%c0_5, %c0_6] : memref<1x96xf32, #tpu.memory_space<vmem>>, vector<1x96xf32>
    %c0_7 = arith.constant 0 : index
    %c0_8 = arith.constant 0 : index
    %4 = vector.load %arg5[%c0_7, %c0_8] : memref<1x32xf32, #tpu.memory_space<vmem>>, vector<1x32xf32>
    %cst = arith.constant dense<0.000000e+00> : vector<64x96xf32>
    %5 = tpu.matmul %0, %1, %cst {dimension_numbers = #tpu.dot_dimension_numbers<[1], [0], [0], [1], [0, 0, 1, 1], [], []>} : vector<64x4xf32>, vector<4x96xf32>, vector<64x96xf32> -> vector<64x96xf32>
    %6 = vector.broadcast %3 : vector<1x96xf32> to vector<64x96xf32>
    %7 = arith.addf %5, %6 : vector<64x96xf32>
    %8 = vector.shape_cast %4 : vector<1x32xf32> to vector<1x32xf32>
    %9 = vector.broadcast %8 : vector<1x32xf32> to vector<8x32xf32>
    %c0_9 = arith.constant 0 : index
    %c0_10 = arith.constant 0 : index
    %c0_11 = arith.constant 0 : index
    %10 = vector.load %arg1[%c0_9, %c0_10, %c0_11] : memref<2x8x32xf32, #tpu.memory_space<vmem>>, vector<1x8x32xf32>
    %11 = vector.shape_cast %10 : vector<1x8x32xf32> to vector<8x32xf32>
    %12 = vector.extract_strided_slice %7 {offsets = [0, 0], sizes = [8, 96], strides = [1, 1]} : vector<64x96xf32> to vector<8x96xf32>
    %cst_12 = arith.constant dense<0.000000e+00> : vector<8x96xf32>
    %13 = tpu.matmul %11, %2, %cst_12 {dimension_numbers = #tpu.dot_dimension_numbers<[1], [0], [0], [1], [0, 0, 1, 1], [], []>} : vector<8x32xf32>, vector<32x96xf32>, vector<8x96xf32> -> vector<8x96xf32>
    %14 = vector.extract_strided_slice %12 {offsets = [0, 0], sizes = [8, 32], strides = [1, 1]} : vector<8x96xf32> to vector<8x32xf32>
    %15 = vector.extract_strided_slice %13 {offsets = [0, 0], sizes = [8, 32], strides = [1, 1]} : vector<8x96xf32> to vector<8x32xf32>
    %16 = arith.addf %14, %15 : vector<8x32xf32>
    %17 = arith.negf %16 : vector<8x32xf32>
    %18 = math.exp %17 : vector<8x32xf32>
    %cst_13 = arith.constant 1.000000e+00 : f32
    %19 = vector.broadcast %cst_13 : f32 to vector<8x32xf32>
    %20 = arith.addf %19, %18 : vector<8x32xf32>
    %21 = arith.divf %19, %20 : vector<8x32xf32>
    %22 = vector.extract_strided_slice %12 {offsets = [0, 32], sizes = [8, 32], strides = [1, 1]} : vector<8x96xf32> to vector<8x32xf32>
    %23 = vector.extract_strided_slice %13 {offsets = [0, 32], sizes = [8, 32], strides = [1, 1]} : vector<8x96xf32> to vector<8x32xf32>
    %24 = arith.addf %22, %23 : vector<8x32xf32>
    %25 = arith.negf %24 : vector<8x32xf32>
    %26 = math.exp %25 : vector<8x32xf32>
    %cst_14 = arith.constant 1.000000e+00 : f32
    %27 = vector.broadcast %cst_14 : f32 to vector<8x32xf32>
    %28 = arith.addf %27, %26 : vector<8x32xf32>
    %29 = arith.divf %27, %28 : vector<8x32xf32>
    %30 = vector.extract_strided_slice %12 {offsets = [0, 64], sizes = [8, 32], strides = [1, 1]} : vector<8x96xf32> to vector<8x32xf32>
    %31 = vector.extract_strided_slice %13 {offsets = [0, 64], sizes = [8, 32], strides = [1, 1]} : vector<8x96xf32> to vector<8x32xf32>
    %32 = arith.addf %31, %9 : vector<8x32xf32>
    %33 = arith.mulf %21, %32 : vector<8x32xf32>
    %34 = arith.addf %30, %33 : vector<8x32xf32>
    %35 = math.tanh %34 : vector<8x32xf32>
    %cst_15 = arith.constant 1.000000e+00 : f32
    %36 = vector.broadcast %cst_15 : f32 to vector<8x32xf32>
    %37 = arith.subf %36, %29 : vector<8x32xf32>
    %38 = arith.mulf %37, %35 : vector<8x32xf32>
    %39 = arith.mulf %29, %11 : vector<8x32xf32>
    %40 = arith.addf %38, %39 : vector<8x32xf32>
    %c0_16 = arith.constant 0 : index
    %c0_17 = arith.constant 0 : index
    %41 = vector.load %arg14[%c0_16, %c0_17] : memref<64x32xf32, #tpu.memory_space<vmem>>, vector<8x32xf32>
    tpu.vector_store %arg14[%c0_16, %c0_17], %40 {strides = array<i32>} : memref<64x32xf32, #tpu.memory_space<vmem>>, vector<8x32xf32>,
    %42 = vector.extract_strided_slice %7 {offsets = [8, 0], sizes = [8, 96], strides = [1, 1]} : vector<64x96xf32> to vector<8x96xf32>
    %cst_18 = arith.constant dense<0.000000e+00> : vector<8x96xf32>
    %43 = tpu.matmul %40, %2, %cst_18 {dimension_numbers = #tpu.dot_dimension_numbers<[1], [0], [0], [1], [0, 0, 1, 1], [], []>} : vector<8x32xf32>, vector<32x96xf32>, vector<8x96xf32> -> vector<8x96xf32>
    %44 = vector.extract_strided_slice %42 {offsets = [0, 0], sizes = [8, 32], strides = [1, 1]} : vector<8x96xf32> to vector<8x32xf32>
    %45 = vector.extract_strided_slice %43 {offsets = [0, 0], sizes = [8, 32], strides = [1, 1]} : vector<8x96xf32> to vector<8x32xf32>
    %46 = arith.addf %44, %45 : vector<8x32xf32>
    %47 = arith.negf %46 : vector<8x32xf32>
    %48 = math.exp %47 : vector<8x32xf32>
    %cst_19 = arith.constant 1.000000e+00 : f32
    %49 = vector.broadcast %cst_19 : f32 to vector<8x32xf32>
    %50 = arith.addf %49, %48 : vector<8x32xf32>
    %51 = arith.divf %49, %50 : vector<8x32xf32>
    %52 = vector.extract_strided_slice %42 {offsets = [0, 32], sizes = [8, 32], strides = [1, 1]} : vector<8x96xf32> to vector<8x32xf32>
    %53 = vector.extract_strided_slice %43 {offsets = [0, 32], sizes = [8, 32], strides = [1, 1]} : vector<8x96xf32> to vector<8x32xf32>
    %54 = arith.addf %52, %53 : vector<8x32xf32>
    %55 = arith.negf %54 : vector<8x32xf32>
    %56 = math.exp %55 : vector<8x32xf32>
    %cst_20 = arith.constant 1.000000e+00 : f32
    %57 = vector.broadcast %cst_20 : f32 to vector<8x32xf32>
    %58 = arith.addf %57, %56 : vector<8x32xf32>
    %59 = arith.divf %57, %58 : vector<8x32xf32>
    %60 = vector.extract_strided_slice %42 {offsets = [0, 64], sizes = [8, 32], strides = [1, 1]} : vector<8x96xf32> to vector<8x32xf32>
    %61 = vector.extract_strided_slice %43 {offsets = [0, 64], sizes = [8, 32], strides = [1, 1]} : vector<8x96xf32> to vector<8x32xf32>
    %62 = arith.addf %61, %9 : vector<8x32xf32>
    %63 = arith.mulf %51, %62 : vector<8x32xf32>
    %64 = arith.addf %60, %63 : vector<8x32xf32>
    %65 = math.tanh %64 : vector<8x32xf32>
    %cst_21 = arith.constant 1.000000e+00 : f32
    %66 = vector.broadcast %cst_21 : f32 to vector<8x32xf32>
    %67 = arith.subf %66, %59 : vector<8x32xf32>
    %68 = arith.mulf %67, %65 : vector<8x32xf32>
    %69 = arith.mulf %59, %40 : vector<8x32xf32>
    %70 = arith.addf %68, %69 : vector<8x32xf32>
    %c8 = arith.constant 8 : index
    %c0_22 = arith.constant 0 : index
    %71 = vector.load %arg14[%c8, %c0_22] : memref<64x32xf32, #tpu.memory_space<vmem>>, vector<8x32xf32>
    tpu.vector_store %arg14[%c8, %c0_22], %70 {strides = array<i32>} : memref<64x32xf32, #tpu.memory_space<vmem>>, vector<8x32xf32>,
    %72 = vector.extract_strided_slice %7 {offsets = [16, 0], sizes = [8, 96], strides = [1, 1]} : vector<64x96xf32> to vector<8x96xf32>
    %cst_23 = arith.constant dense<0.000000e+00> : vector<8x96xf32>
    %73 = tpu.matmul %70, %2, %cst_23 {dimension_numbers = #tpu.dot_dimension_numbers<[1], [0], [0], [1], [0, 0, 1, 1], [], []>} : vector<8x32xf32>, vector<32x96xf32>, vector<8x96xf32> -> vector<8x96xf32>
    %74 = vector.extract_strided_slice %72 {offsets = [0, 0], sizes = [8, 32], strides = [1, 1]} : vector<8x96xf32> to vector<8x32xf32>
    %75 = vector.extract_strided_slice %73 {offsets = [0, 0], sizes = [8, 32], strides = [1, 1]} : vector<8x96xf32> to vector<8x32xf32>
    %76 = arith.addf %74, %75 : vector<8x32xf32>
    %77 = arith.negf %76 : vector<8x32xf32>
    %78 = math.exp %77 : vector<8x32xf32>
    %cst_24 = arith.constant 1.000000e+00 : f32
    %79 = vector.broadcast %cst_24 : f32 to vector<8x32xf32>
    %80 = arith.addf %79, %78 : vector<8x32xf32>
    %81 = arith.divf %79, %80 : vector<8x32xf32>
    %82 = vector.extract_strided_slice %72 {offsets = [0, 32], sizes = [8, 32], strides = [1, 1]} : vector<8x96xf32> to vector<8x32xf32>
    %83 = vector.extract_strided_slice %73 {offsets = [0, 32], sizes = [8, 32], strides = [1, 1]} : vector<8x96xf32> to vector<8x32xf32>
    %84 = arith.addf %82, %83 : vector<8x32xf32>
    %85 = arith.negf %84 : vector<8x32xf32>
    %86 = math.exp %85 : vector<8x32xf32>
    %cst_25 = arith.constant 1.000000e+00 : f32
    %87 = vector.broadcast %cst_25 : f32 to vector<8x32xf32>
    %88 = arith.addf %87, %86 : vector<8x32xf32>
    %89 = arith.divf %87, %88 : vector<8x32xf32>
    %90 = vector.extract_strided_slice %72 {offsets = [0, 64], sizes = [8, 32], strides = [1, 1]} : vector<8x96xf32> to vector<8x32xf32>
    %91 = vector.extract_strided_slice %73 {offsets = [0, 64], sizes = [8, 32], strides = [1, 1]} : vector<8x96xf32> to vector<8x32xf32>
    %92 = arith.addf %91, %9 : vector<8x32xf32>
    %93 = arith.mulf %81, %92 : vector<8x32xf32>
    %94 = arith.addf %90, %93 : vector<8x32xf32>
    %95 = math.tanh %94 : vector<8x32xf32>
    %cst_26 = arith.constant 1.000000e+00 : f32
    %96 = vector.broadcast %cst_26 : f32 to vector<8x32xf32>
    %97 = arith.subf %96, %89 : vector<8x32xf32>
    %98 = arith.mulf %97, %95 : vector<8x32xf32>
    %99 = arith.mulf %89, %70 : vector<8x32xf32>
    %100 = arith.addf %98, %99 : vector<8x32xf32>
    %c16 = arith.constant 16 : index
    %c0_27 = arith.constant 0 : index
    %101 = vector.load %arg14[%c16, %c0_27] : memref<64x32xf32, #tpu.memory_space<vmem>>, vector<8x32xf32>
    tpu.vector_store %arg14[%c16, %c0_27], %100 {strides = array<i32>} : memref<64x32xf32, #tpu.memory_space<vmem>>, vector<8x32xf32>,
    %102 = vector.extract_strided_slice %7 {offsets = [24, 0], sizes = [8, 96], strides = [1, 1]} : vector<64x96xf32> to vector<8x96xf32>
    %cst_28 = arith.constant dense<0.000000e+00> : vector<8x96xf32>
    %103 = tpu.matmul %100, %2, %cst_28 {dimension_numbers = #tpu.dot_dimension_numbers<[1], [0], [0], [1], [0, 0, 1, 1], [], []>} : vector<8x32xf32>, vector<32x96xf32>, vector<8x96xf32> -> vector<8x96xf32>
    %104 = vector.extract_strided_slice %102 {offsets = [0, 0], sizes = [8, 32], strides = [1, 1]} : vector<8x96xf32> to vector<8x32xf32>
    %105 = vector.extract_strided_slice %103 {offsets = [0, 0], sizes = [8, 32], strides = [1, 1]} : vector<8x96xf32> to vector<8x32xf32>
    %106 = arith.addf %104, %105 : vector<8x32xf32>
    %107 = arith.negf %106 : vector<8x32xf32>
    %108 = math.exp %107 : vector<8x32xf32>
    %cst_29 = arith.constant 1.000000e+00 : f32
    %109 = vector.broadcast %cst_29 : f32 to vector<8x32xf32>
    %110 = arith.addf %109, %108 : vector<8x32xf32>
    %111 = arith.divf %109, %110 : vector<8x32xf32>
    %112 = vector.extract_strided_slice %102 {offsets = [0, 32], sizes = [8, 32], strides = [1, 1]} : vector<8x96xf32> to vector<8x32xf32>
    %113 = vector.extract_strided_slice %103 {offsets = [0, 32], sizes = [8, 32], strides = [1, 1]} : vector<8x96xf32> to vector<8x32xf32>
    %114 = arith.addf %112, %113 : vector<8x32xf32>
    %115 = arith.negf %114 : vector<8x32xf32>
    %116 = math.exp %115 : vector<8x32xf32>
    %cst_30 = arith.constant 1.000000e+00 : f32
    %117 = vector.broadcast %cst_30 : f32 to vector<8x32xf32>
    %118 = arith.addf %117, %116 : vector<8x32xf32>
    %119 = arith.divf %117, %118 : vector<8x32xf32>
    %120 = vector.extract_strided_slice %102 {offsets = [0, 64], sizes = [8, 32], strides = [1, 1]} : vector<8x96xf32> to vector<8x32xf32>
    %121 = vector.extract_strided_slice %103 {offsets = [0, 64], sizes = [8, 32], strides = [1, 1]} : vector<8x96xf32> to vector<8x32xf32>
    %122 = arith.addf %121, %9 : vector<8x32xf32>
    %123 = arith.mulf %111, %122 : vector<8x32xf32>
    %124 = arith.addf %120, %123 : vector<8x32xf32>
    %125 = math.tanh %124 : vector<8x32xf32>
    %cst_31 = arith.constant 1.000000e+00 : f32
    %126 = vector.broadcast %cst_31 : f32 to vector<8x32xf32>
    %127 = arith.subf %126, %119 : vector<8x32xf32>
    %128 = arith.mulf %127, %125 : vector<8x32xf32>
    %129 = arith.mulf %119, %100 : vector<8x32xf32>
    %130 = arith.addf %128, %129 : vector<8x32xf32>
    %c24 = arith.constant 24 : index
    %c0_32 = arith.constant 0 : index
    %131 = vector.load %arg14[%c24, %c0_32] : memref<64x32xf32, #tpu.memory_space<vmem>>, vector<8x32xf32>
    tpu.vector_store %arg14[%c24, %c0_32], %130 {strides = array<i32>} : memref<64x32xf32, #tpu.memory_space<vmem>>, vector<8x32xf32>,
    %132 = vector.extract_strided_slice %7 {offsets = [32, 0], sizes = [8, 96], strides = [1, 1]} : vector<64x96xf32> to vector<8x96xf32>
    %cst_33 = arith.constant dense<0.000000e+00> : vector<8x96xf32>
    %133 = tpu.matmul %130, %2, %cst_33 {dimension_numbers = #tpu.dot_dimension_numbers<[1], [0], [0], [1], [0, 0, 1, 1], [], []>} : vector<8x32xf32>, vector<32x96xf32>, vector<8x96xf32> -> vector<8x96xf32>
    %134 = vector.extract_strided_slice %132 {offsets = [0, 0], sizes = [8, 32], strides = [1, 1]} : vector<8x96xf32> to vector<8x32xf32>
    %135 = vector.extract_strided_slice %133 {offsets = [0, 0], sizes = [8, 32], strides = [1, 1]} : vector<8x96xf32> to vector<8x32xf32>
    %136 = arith.addf %134, %135 : vector<8x32xf32>
    %137 = arith.negf %136 : vector<8x32xf32>
    %138 = math.exp %137 : vector<8x32xf32>
    %cst_34 = arith.constant 1.000000e+00 : f32
    %139 = vector.broadcast %cst_34 : f32 to vector<8x32xf32>
    %140 = arith.addf %139, %138 : vector<8x32xf32>
    %141 = arith.divf %139, %140 : vector<8x32xf32>
    %142 = vector.extract_strided_slice %132 {offsets = [0, 32], sizes = [8, 32], strides = [1, 1]} : vector<8x96xf32> to vector<8x32xf32>
    %143 = vector.extract_strided_slice %133 {offsets = [0, 32], sizes = [8, 32], strides = [1, 1]} : vector<8x96xf32> to vector<8x32xf32>
    %144 = arith.addf %142, %143 : vector<8x32xf32>
    %145 = arith.negf %144 : vector<8x32xf32>
    %146 = math.exp %145 : vector<8x32xf32>
    %cst_35 = arith.constant 1.000000e+00 : f32
    %147 = vector.broadcast %cst_35 : f32 to vector<8x32xf32>
    %148 = arith.addf %147, %146 : vector<8x32xf32>
    %149 = arith.divf %147, %148 : vector<8x32xf32>
    %150 = vector.extract_strided_slice %132 {offsets = [0, 64], sizes = [8, 32], strides = [1, 1]} : vector<8x96xf32> to vector<8x32xf32>
    %151 = vector.extract_strided_slice %133 {offsets = [0, 64], sizes = [8, 32], strides = [1, 1]} : vector<8x96xf32> to vector<8x32xf32>
    %152 = arith.addf %151, %9 : vector<8x32xf32>
    %153 = arith.mulf %141, %152 : vector<8x32xf32>
    %154 = arith.addf %150, %153 : vector<8x32xf32>
    %155 = math.tanh %154 : vector<8x32xf32>
    %cst_36 = arith.constant 1.000000e+00 : f32
    %156 = vector.broadcast %cst_36 : f32 to vector<8x32xf32>
    %157 = arith.subf %156, %149 : vector<8x32xf32>
    %158 = arith.mulf %157, %155 : vector<8x32xf32>
    %159 = arith.mulf %149, %130 : vector<8x32xf32>
    %160 = arith.addf %158, %159 : vector<8x32xf32>
    %c32 = arith.constant 32 : index
    %c0_37 = arith.constant 0 : index
    %161 = vector.load %arg14[%c32, %c0_37] : memref<64x32xf32, #tpu.memory_space<vmem>>, vector<8x32xf32>
    tpu.vector_store %arg14[%c32, %c0_37], %160 {strides = array<i32>} : memref<64x32xf32, #tpu.memory_space<vmem>>, vector<8x32xf32>,
    %162 = vector.extract_strided_slice %7 {offsets = [40, 0], sizes = [8, 96], strides = [1, 1]} : vector<64x96xf32> to vector<8x96xf32>
    %cst_38 = arith.constant dense<0.000000e+00> : vector<8x96xf32>
    %163 = tpu.matmul %160, %2, %cst_38 {dimension_numbers = #tpu.dot_dimension_numbers<[1], [0], [0], [1], [0, 0, 1, 1], [], []>} : vector<8x32xf32>, vector<32x96xf32>, vector<8x96xf32> -> vector<8x96xf32>
    %164 = vector.extract_strided_slice %162 {offsets = [0, 0], sizes = [8, 32], strides = [1, 1]} : vector<8x96xf32> to vector<8x32xf32>
    %165 = vector.extract_strided_slice %163 {offsets = [0, 0], sizes = [8, 32], strides = [1, 1]} : vector<8x96xf32> to vector<8x32xf32>
    %166 = arith.addf %164, %165 : vector<8x32xf32>
    %167 = arith.negf %166 : vector<8x32xf32>
    %168 = math.exp %167 : vector<8x32xf32>
    %cst_39 = arith.constant 1.000000e+00 : f32
    %169 = vector.broadcast %cst_39 : f32 to vector<8x32xf32>
    %170 = arith.addf %169, %168 : vector<8x32xf32>
    %171 = arith.divf %169, %170 : vector<8x32xf32>
    %172 = vector.extract_strided_slice %162 {offsets = [0, 32], sizes = [8, 32], strides = [1, 1]} : vector<8x96xf32> to vector<8x32xf32>
    %173 = vector.extract_strided_slice %163 {offsets = [0, 32], sizes = [8, 32], strides = [1, 1]} : vector<8x96xf32> to vector<8x32xf32>
    %174 = arith.addf %172, %173 : vector<8x32xf32>
    %175 = arith.negf %174 : vector<8x32xf32>
    %176 = math.exp %175 : vector<8x32xf32>
    %cst_40 = arith.constant 1.000000e+00 : f32
    %177 = vector.broadcast %cst_40 : f32 to vector<8x32xf32>
    %178 = arith.addf %177, %176 : vector<8x32xf32>
    %179 = arith.divf %177, %178 : vector<8x32xf32>
    %180 = vector.extract_strided_slice %162 {offsets = [0, 64], sizes = [8, 32], strides = [1, 1]} : vector<8x96xf32> to vector<8x32xf32>
    %181 = vector.extract_strided_slice %163 {offsets = [0, 64], sizes = [8, 32], strides = [1, 1]} : vector<8x96xf32> to vector<8x32xf32>
    %182 = arith.addf %181, %9 : vector<8x32xf32>
    %183 = arith.mulf %171, %182 : vector<8x32xf32>
    %184 = arith.addf %180, %183 : vector<8x32xf32>
    %185 = math.tanh %184 : vector<8x32xf32>
    %cst_41 = arith.constant 1.000000e+00 : f32
    %186 = vector.broadcast %cst_41 : f32 to vector<8x32xf32>
    %187 = arith.subf %186, %179 : vector<8x32xf32>
    %188 = arith.mulf %187, %185 : vector<8x32xf32>
    %189 = arith.mulf %179, %160 : vector<8x32xf32>
    %190 = arith.addf %188, %189 : vector<8x32xf32>
    %c40 = arith.constant 40 : index
    %c0_42 = arith.constant 0 : index
    %191 = vector.load %arg14[%c40, %c0_42] : memref<64x32xf32, #tpu.memory_space<vmem>>, vector<8x32xf32>
    tpu.vector_store %arg14[%c40, %c0_42], %190 {strides = array<i32>} : memref<64x32xf32, #tpu.memory_space<vmem>>, vector<8x32xf32>,
    %192 = vector.extract_strided_slice %7 {offsets = [48, 0], sizes = [8, 96], strides = [1, 1]} : vector<64x96xf32> to vector<8x96xf32>
    %cst_43 = arith.constant dense<0.000000e+00> : vector<8x96xf32>
    %193 = tpu.matmul %190, %2, %cst_43 {dimension_numbers = #tpu.dot_dimension_numbers<[1], [0], [0], [1], [0, 0, 1, 1], [], []>} : vector<8x32xf32>, vector<32x96xf32>, vector<8x96xf32> -> vector<8x96xf32>
    %194 = vector.extract_strided_slice %192 {offsets = [0, 0], sizes = [8, 32], strides = [1, 1]} : vector<8x96xf32> to vector<8x32xf32>
    %195 = vector.extract_strided_slice %193 {offsets = [0, 0], sizes = [8, 32], strides = [1, 1]} : vector<8x96xf32> to vector<8x32xf32>
    %196 = arith.addf %194, %195 : vector<8x32xf32>
    %197 = arith.negf %196 : vector<8x32xf32>
    %198 = math.exp %197 : vector<8x32xf32>
    %cst_44 = arith.constant 1.000000e+00 : f32
    %199 = vector.broadcast %cst_44 : f32 to vector<8x32xf32>
    %200 = arith.addf %199, %198 : vector<8x32xf32>
    %201 = arith.divf %199, %200 : vector<8x32xf32>
    %202 = vector.extract_strided_slice %192 {offsets = [0, 32], sizes = [8, 32], strides = [1, 1]} : vector<8x96xf32> to vector<8x32xf32>
    %203 = vector.extract_strided_slice %193 {offsets = [0, 32], sizes = [8, 32], strides = [1, 1]} : vector<8x96xf32> to vector<8x32xf32>
    %204 = arith.addf %202, %203 : vector<8x32xf32>
    %205 = arith.negf %204 : vector<8x32xf32>
    %206 = math.exp %205 : vector<8x32xf32>
    %cst_45 = arith.constant 1.000000e+00 : f32
    %207 = vector.broadcast %cst_45 : f32 to vector<8x32xf32>
    %208 = arith.addf %207, %206 : vector<8x32xf32>
    %209 = arith.divf %207, %208 : vector<8x32xf32>
    %210 = vector.extract_strided_slice %192 {offsets = [0, 64], sizes = [8, 32], strides = [1, 1]} : vector<8x96xf32> to vector<8x32xf32>
    %211 = vector.extract_strided_slice %193 {offsets = [0, 64], sizes = [8, 32], strides = [1, 1]} : vector<8x96xf32> to vector<8x32xf32>
    %212 = arith.addf %211, %9 : vector<8x32xf32>
    %213 = arith.mulf %201, %212 : vector<8x32xf32>
    %214 = arith.addf %210, %213 : vector<8x32xf32>
    %215 = math.tanh %214 : vector<8x32xf32>
    %cst_46 = arith.constant 1.000000e+00 : f32
    %216 = vector.broadcast %cst_46 : f32 to vector<8x32xf32>
    %217 = arith.subf %216, %209 : vector<8x32xf32>
    %218 = arith.mulf %217, %215 : vector<8x32xf32>
    %219 = arith.mulf %209, %190 : vector<8x32xf32>
    %220 = arith.addf %218, %219 : vector<8x32xf32>
    %c48 = arith.constant 48 : index
    %c0_47 = arith.constant 0 : index
    %221 = vector.load %arg14[%c48, %c0_47] : memref<64x32xf32, #tpu.memory_space<vmem>>, vector<8x32xf32>
    tpu.vector_store %arg14[%c48, %c0_47], %220 {strides = array<i32>} : memref<64x32xf32, #tpu.memory_space<vmem>>, vector<8x32xf32>,
    %222 = vector.extract_strided_slice %7 {offsets = [56, 0], sizes = [8, 96], strides = [1, 1]} : vector<64x96xf32> to vector<8x96xf32>
    %cst_48 = arith.constant dense<0.000000e+00> : vector<8x96xf32>
    %223 = tpu.matmul %220, %2, %cst_48 {dimension_numbers = #tpu.dot_dimension_numbers<[1], [0], [0], [1], [0, 0, 1, 1], [], []>} : vector<8x32xf32>, vector<32x96xf32>, vector<8x96xf32> -> vector<8x96xf32>
    %224 = vector.extract_strided_slice %222 {offsets = [0, 0], sizes = [8, 32], strides = [1, 1]} : vector<8x96xf32> to vector<8x32xf32>
    %225 = vector.extract_strided_slice %223 {offsets = [0, 0], sizes = [8, 32], strides = [1, 1]} : vector<8x96xf32> to vector<8x32xf32>
    %226 = arith.addf %224, %225 : vector<8x32xf32>
    %227 = arith.negf %226 : vector<8x32xf32>
    %228 = math.exp %227 : vector<8x32xf32>
    %cst_49 = arith.constant 1.000000e+00 : f32
    %229 = vector.broadcast %cst_49 : f32 to vector<8x32xf32>
    %230 = arith.addf %229, %228 : vector<8x32xf32>
    %231 = arith.divf %229, %230 : vector<8x32xf32>
    %232 = vector.extract_strided_slice %222 {offsets = [0, 32], sizes = [8, 32], strides = [1, 1]} : vector<8x96xf32> to vector<8x32xf32>
    %233 = vector.extract_strided_slice %223 {offsets = [0, 32], sizes = [8, 32], strides = [1, 1]} : vector<8x96xf32> to vector<8x32xf32>
    %234 = arith.addf %232, %233 : vector<8x32xf32>
    %235 = arith.negf %234 : vector<8x32xf32>
    %236 = math.exp %235 : vector<8x32xf32>
    %cst_50 = arith.constant 1.000000e+00 : f32
    %237 = vector.broadcast %cst_50 : f32 to vector<8x32xf32>
    %238 = arith.addf %237, %236 : vector<8x32xf32>
    %239 = arith.divf %237, %238 : vector<8x32xf32>
    %240 = vector.extract_strided_slice %222 {offsets = [0, 64], sizes = [8, 32], strides = [1, 1]} : vector<8x96xf32> to vector<8x32xf32>
    %241 = vector.extract_strided_slice %223 {offsets = [0, 64], sizes = [8, 32], strides = [1, 1]} : vector<8x96xf32> to vector<8x32xf32>
    %242 = arith.addf %241, %9 : vector<8x32xf32>
    %243 = arith.mulf %231, %242 : vector<8x32xf32>
    %244 = arith.addf %240, %243 : vector<8x32xf32>
    %245 = math.tanh %244 : vector<8x32xf32>
    %cst_51 = arith.constant 1.000000e+00 : f32
    %246 = vector.broadcast %cst_51 : f32 to vector<8x32xf32>
    %247 = arith.subf %246, %239 : vector<8x32xf32>
    %248 = arith.mulf %247, %245 : vector<8x32xf32>
    %249 = arith.mulf %239, %220 : vector<8x32xf32>
    %250 = arith.addf %248, %249 : vector<8x32xf32>
    %c56 = arith.constant 56 : index
    %c0_52 = arith.constant 0 : index
    %251 = vector.load %arg14[%c56, %c0_52] : memref<64x32xf32, #tpu.memory_space<vmem>>, vector<8x32xf32>
    tpu.vector_store %arg14[%c56, %c0_52], %250 {strides = array<i32>} : memref<64x32xf32, #tpu.memory_space<vmem>>, vector<8x32xf32>,
    %c0_53 = arith.constant 0 : index
    %c0_54 = arith.constant 0 : index
    %c0_55 = arith.constant 0 : index
    %252 = vector.load %arg13[%c0_53, %c0_54, %c0_55] : memref<2x8x32xf32, #tpu.memory_space<vmem>>, vector<1x8x32xf32>
    %253 = vector.shape_cast %252 : vector<1x8x32xf32> to vector<8x32xf32>
    %254 = vector.shape_cast %250 : vector<8x32xf32> to vector<1x8x32xf32>
    tpu.vector_store %arg13[%c0_53, %c0_54, %c0_55], %254 {strides = array<i32>} : memref<2x8x32xf32, #tpu.memory_space<vmem>>, vector<1x8x32xf32>,
    %c0_56 = arith.constant 0 : index
    %c0_57 = arith.constant 0 : index
    %255 = vector.load %arg14[%c0_56, %c0_57] : memref<64x32xf32, #tpu.memory_space<vmem>>, vector<64x32xf32>
    %c0_58 = arith.constant 0 : index
    %c0_59 = arith.constant 0 : index
    %256 = vector.load %arg6[%c0_58, %c0_59] : memref<32x96xf32, #tpu.memory_space<vmem>>, vector<32x96xf32>
    %c0_60 = arith.constant 0 : index
    %c0_61 = arith.constant 0 : index
    %257 = vector.load %arg7[%c0_60, %c0_61] : memref<32x96xf32, #tpu.memory_space<vmem>>, vector<32x96xf32>
    %c0_62 = arith.constant 0 : index
    %c0_63 = arith.constant 0 : index
    %258 = vector.load %arg8[%c0_62, %c0_63] : memref<1x96xf32, #tpu.memory_space<vmem>>, vector<1x96xf32>
    %c0_64 = arith.constant 0 : index
    %c0_65 = arith.constant 0 : index
    %259 = vector.load %arg9[%c0_64, %c0_65] : memref<1x32xf32, #tpu.memory_space<vmem>>, vector<1x32xf32>
    %cst_66 = arith.constant dense<0.000000e+00> : vector<64x96xf32>
    %260 = tpu.matmul %255, %256, %cst_66 {dimension_numbers = #tpu.dot_dimension_numbers<[1], [0], [0], [1], [0, 0, 1, 1], [], []>} : vector<64x32xf32>, vector<32x96xf32>, vector<64x96xf32> -> vector<64x96xf32>
    %261 = vector.broadcast %258 : vector<1x96xf32> to vector<64x96xf32>
    %262 = arith.addf %260, %261 : vector<64x96xf32>
    %263 = vector.shape_cast %259 : vector<1x32xf32> to vector<1x32xf32>
    %264 = vector.broadcast %263 : vector<1x32xf32> to vector<8x32xf32>
    %c1 = arith.constant 1 : index
    %c0_67 = arith.constant 0 : index
    %c0_68 = arith.constant 0 : index
    %265 = vector.load %arg1[%c1, %c0_67, %c0_68] : memref<2x8x32xf32, #tpu.memory_space<vmem>>, vector<1x8x32xf32>
    %266 = vector.shape_cast %265 : vector<1x8x32xf32> to vector<8x32xf32>
    %267 = vector.extract_strided_slice %262 {offsets = [0, 0], sizes = [8, 96], strides = [1, 1]} : vector<64x96xf32> to vector<8x96xf32>
    %cst_69 = arith.constant dense<0.000000e+00> : vector<8x96xf32>
    %268 = tpu.matmul %266, %257, %cst_69 {dimension_numbers = #tpu.dot_dimension_numbers<[1], [0], [0], [1], [0, 0, 1, 1], [], []>} : vector<8x32xf32>, vector<32x96xf32>, vector<8x96xf32> -> vector<8x96xf32>
    %269 = vector.extract_strided_slice %267 {offsets = [0, 0], sizes = [8, 32], strides = [1, 1]} : vector<8x96xf32> to vector<8x32xf32>
    %270 = vector.extract_strided_slice %268 {offsets = [0, 0], sizes = [8, 32], strides = [1, 1]} : vector<8x96xf32> to vector<8x32xf32>
    %271 = arith.addf %269, %270 : vector<8x32xf32>
    %272 = arith.negf %271 : vector<8x32xf32>
    %273 = math.exp %272 : vector<8x32xf32>
    %cst_70 = arith.constant 1.000000e+00 : f32
    %274 = vector.broadcast %cst_70 : f32 to vector<8x32xf32>
    %275 = arith.addf %274, %273 : vector<8x32xf32>
    %276 = arith.divf %274, %275 : vector<8x32xf32>
    %277 = vector.extract_strided_slice %267 {offsets = [0, 32], sizes = [8, 32], strides = [1, 1]} : vector<8x96xf32> to vector<8x32xf32>
    %278 = vector.extract_strided_slice %268 {offsets = [0, 32], sizes = [8, 32], strides = [1, 1]} : vector<8x96xf32> to vector<8x32xf32>
    %279 = arith.addf %277, %278 : vector<8x32xf32>
    %280 = arith.negf %279 : vector<8x32xf32>
    %281 = math.exp %280 : vector<8x32xf32>
    %cst_71 = arith.constant 1.000000e+00 : f32
    %282 = vector.broadcast %cst_71 : f32 to vector<8x32xf32>
    %283 = arith.addf %282, %281 : vector<8x32xf32>
    %284 = arith.divf %282, %283 : vector<8x32xf32>
    %285 = vector.extract_strided_slice %267 {offsets = [0, 64], sizes = [8, 32], strides = [1, 1]} : vector<8x96xf32> to vector<8x32xf32>
    %286 = vector.extract_strided_slice %268 {offsets = [0, 64], sizes = [8, 32], strides = [1, 1]} : vector<8x96xf32> to vector<8x32xf32>
    %287 = arith.addf %286, %264 : vector<8x32xf32>
    %288 = arith.mulf %276, %287 : vector<8x32xf32>
    %289 = arith.addf %285, %288 : vector<8x32xf32>
    %290 = math.tanh %289 : vector<8x32xf32>
    %cst_72 = arith.constant 1.000000e+00 : f32
    %291 = vector.broadcast %cst_72 : f32 to vector<8x32xf32>
    %292 = arith.subf %291, %284 : vector<8x32xf32>
    %293 = arith.mulf %292, %290 : vector<8x32xf32>
    %294 = arith.mulf %284, %266 : vector<8x32xf32>
    %295 = arith.addf %293, %294 : vector<8x32xf32>
    %c0_73 = arith.constant 0 : index
    %c0_74 = arith.constant 0 : index
    %296 = vector.load %arg14[%c0_73, %c0_74] : memref<64x32xf32, #tpu.memory_space<vmem>>, vector<8x32xf32>
    tpu.vector_store %arg14[%c0_73, %c0_74], %295 {strides = array<i32>} : memref<64x32xf32, #tpu.memory_space<vmem>>, vector<8x32xf32>,
    %297 = vector.extract_strided_slice %262 {offsets = [8, 0], sizes = [8, 96], strides = [1, 1]} : vector<64x96xf32> to vector<8x96xf32>
    %cst_75 = arith.constant dense<0.000000e+00> : vector<8x96xf32>
    %298 = tpu.matmul %295, %257, %cst_75 {dimension_numbers = #tpu.dot_dimension_numbers<[1], [0], [0], [1], [0, 0, 1, 1], [], []>} : vector<8x32xf32>, vector<32x96xf32>, vector<8x96xf32> -> vector<8x96xf32>
    %299 = vector.extract_strided_slice %297 {offsets = [0, 0], sizes = [8, 32], strides = [1, 1]} : vector<8x96xf32> to vector<8x32xf32>
    %300 = vector.extract_strided_slice %298 {offsets = [0, 0], sizes = [8, 32], strides = [1, 1]} : vector<8x96xf32> to vector<8x32xf32>
    %301 = arith.addf %299, %300 : vector<8x32xf32>
    %302 = arith.negf %301 : vector<8x32xf32>
    %303 = math.exp %302 : vector<8x32xf32>
    %cst_76 = arith.constant 1.000000e+00 : f32
    %304 = vector.broadcast %cst_76 : f32 to vector<8x32xf32>
    %305 = arith.addf %304, %303 : vector<8x32xf32>
    %306 = arith.divf %304, %305 : vector<8x32xf32>
    %307 = vector.extract_strided_slice %297 {offsets = [0, 32], sizes = [8, 32], strides = [1, 1]} : vector<8x96xf32> to vector<8x32xf32>
    %308 = vector.extract_strided_slice %298 {offsets = [0, 32], sizes = [8, 32], strides = [1, 1]} : vector<8x96xf32> to vector<8x32xf32>
    %309 = arith.addf %307, %308 : vector<8x32xf32>
    %310 = arith.negf %309 : vector<8x32xf32>
    %311 = math.exp %310 : vector<8x32xf32>
    %cst_77 = arith.constant 1.000000e+00 : f32
    %312 = vector.broadcast %cst_77 : f32 to vector<8x32xf32>
    %313 = arith.addf %312, %311 : vector<8x32xf32>
    %314 = arith.divf %312, %313 : vector<8x32xf32>
    %315 = vector.extract_strided_slice %297 {offsets = [0, 64], sizes = [8, 32], strides = [1, 1]} : vector<8x96xf32> to vector<8x32xf32>
    %316 = vector.extract_strided_slice %298 {offsets = [0, 64], sizes = [8, 32], strides = [1, 1]} : vector<8x96xf32> to vector<8x32xf32>
    %317 = arith.addf %316, %264 : vector<8x32xf32>
    %318 = arith.mulf %306, %317 : vector<8x32xf32>
    %319 = arith.addf %315, %318 : vector<8x32xf32>
    %320 = math.tanh %319 : vector<8x32xf32>
    %cst_78 = arith.constant 1.000000e+00 : f32
    %321 = vector.broadcast %cst_78 : f32 to vector<8x32xf32>
    %322 = arith.subf %321, %314 : vector<8x32xf32>
    %323 = arith.mulf %322, %320 : vector<8x32xf32>
    %324 = arith.mulf %314, %295 : vector<8x32xf32>
    %325 = arith.addf %323, %324 : vector<8x32xf32>
    %c8_79 = arith.constant 8 : index
    %c0_80 = arith.constant 0 : index
    %326 = vector.load %arg14[%c8_79, %c0_80] : memref<64x32xf32, #tpu.memory_space<vmem>>, vector<8x32xf32>
    tpu.vector_store %arg14[%c8_79, %c0_80], %325 {strides = array<i32>} : memref<64x32xf32, #tpu.memory_space<vmem>>, vector<8x32xf32>,
    %327 = vector.extract_strided_slice %262 {offsets = [16, 0], sizes = [8, 96], strides = [1, 1]} : vector<64x96xf32> to vector<8x96xf32>
    %cst_81 = arith.constant dense<0.000000e+00> : vector<8x96xf32>
    %328 = tpu.matmul %325, %257, %cst_81 {dimension_numbers = #tpu.dot_dimension_numbers<[1], [0], [0], [1], [0, 0, 1, 1], [], []>} : vector<8x32xf32>, vector<32x96xf32>, vector<8x96xf32> -> vector<8x96xf32>
    %329 = vector.extract_strided_slice %327 {offsets = [0, 0], sizes = [8, 32], strides = [1, 1]} : vector<8x96xf32> to vector<8x32xf32>
    %330 = vector.extract_strided_slice %328 {offsets = [0, 0], sizes = [8, 32], strides = [1, 1]} : vector<8x96xf32> to vector<8x32xf32>
    %331 = arith.addf %329, %330 : vector<8x32xf32>
    %332 = arith.negf %331 : vector<8x32xf32>
    %333 = math.exp %332 : vector<8x32xf32>
    %cst_82 = arith.constant 1.000000e+00 : f32
    %334 = vector.broadcast %cst_82 : f32 to vector<8x32xf32>
    %335 = arith.addf %334, %333 : vector<8x32xf32>
    %336 = arith.divf %334, %335 : vector<8x32xf32>
    %337 = vector.extract_strided_slice %327 {offsets = [0, 32], sizes = [8, 32], strides = [1, 1]} : vector<8x96xf32> to vector<8x32xf32>
    %338 = vector.extract_strided_slice %328 {offsets = [0, 32], sizes = [8, 32], strides = [1, 1]} : vector<8x96xf32> to vector<8x32xf32>
    %339 = arith.addf %337, %338 : vector<8x32xf32>
    %340 = arith.negf %339 : vector<8x32xf32>
    %341 = math.exp %340 : vector<8x32xf32>
    %cst_83 = arith.constant 1.000000e+00 : f32
    %342 = vector.broadcast %cst_83 : f32 to vector<8x32xf32>
    %343 = arith.addf %342, %341 : vector<8x32xf32>
    %344 = arith.divf %342, %343 : vector<8x32xf32>
    %345 = vector.extract_strided_slice %327 {offsets = [0, 64], sizes = [8, 32], strides = [1, 1]} : vector<8x96xf32> to vector<8x32xf32>
    %346 = vector.extract_strided_slice %328 {offsets = [0, 64], sizes = [8, 32], strides = [1, 1]} : vector<8x96xf32> to vector<8x32xf32>
    %347 = arith.addf %346, %264 : vector<8x32xf32>
    %348 = arith.mulf %336, %347 : vector<8x32xf32>
    %349 = arith.addf %345, %348 : vector<8x32xf32>
    %350 = math.tanh %349 : vector<8x32xf32>
    %cst_84 = arith.constant 1.000000e+00 : f32
    %351 = vector.broadcast %cst_84 : f32 to vector<8x32xf32>
    %352 = arith.subf %351, %344 : vector<8x32xf32>
    %353 = arith.mulf %352, %350 : vector<8x32xf32>
    %354 = arith.mulf %344, %325 : vector<8x32xf32>
    %355 = arith.addf %353, %354 : vector<8x32xf32>
    %c16_85 = arith.constant 16 : index
    %c0_86 = arith.constant 0 : index
    %356 = vector.load %arg14[%c16_85, %c0_86] : memref<64x32xf32, #tpu.memory_space<vmem>>, vector<8x32xf32>
    tpu.vector_store %arg14[%c16_85, %c0_86], %355 {strides = array<i32>} : memref<64x32xf32, #tpu.memory_space<vmem>>, vector<8x32xf32>,
    %357 = vector.extract_strided_slice %262 {offsets = [24, 0], sizes = [8, 96], strides = [1, 1]} : vector<64x96xf32> to vector<8x96xf32>
    %cst_87 = arith.constant dense<0.000000e+00> : vector<8x96xf32>
    %358 = tpu.matmul %355, %257, %cst_87 {dimension_numbers = #tpu.dot_dimension_numbers<[1], [0], [0], [1], [0, 0, 1, 1], [], []>} : vector<8x32xf32>, vector<32x96xf32>, vector<8x96xf32> -> vector<8x96xf32>
    %359 = vector.extract_strided_slice %357 {offsets = [0, 0], sizes = [8, 32], strides = [1, 1]} : vector<8x96xf32> to vector<8x32xf32>
    %360 = vector.extract_strided_slice %358 {offsets = [0, 0], sizes = [8, 32], strides = [1, 1]} : vector<8x96xf32> to vector<8x32xf32>
    %361 = arith.addf %359, %360 : vector<8x32xf32>
    %362 = arith.negf %361 : vector<8x32xf32>
    %363 = math.exp %362 : vector<8x32xf32>
    %cst_88 = arith.constant 1.000000e+00 : f32
    %364 = vector.broadcast %cst_88 : f32 to vector<8x32xf32>
    %365 = arith.addf %364, %363 : vector<8x32xf32>
    %366 = arith.divf %364, %365 : vector<8x32xf32>
    %367 = vector.extract_strided_slice %357 {offsets = [0, 32], sizes = [8, 32], strides = [1, 1]} : vector<8x96xf32> to vector<8x32xf32>
    %368 = vector.extract_strided_slice %358 {offsets = [0, 32], sizes = [8, 32], strides = [1, 1]} : vector<8x96xf32> to vector<8x32xf32>
    %369 = arith.addf %367, %368 : vector<8x32xf32>
    %370 = arith.negf %369 : vector<8x32xf32>
    %371 = math.exp %370 : vector<8x32xf32>
    %cst_89 = arith.constant 1.000000e+00 : f32
    %372 = vector.broadcast %cst_89 : f32 to vector<8x32xf32>
    %373 = arith.addf %372, %371 : vector<8x32xf32>
    %374 = arith.divf %372, %373 : vector<8x32xf32>
    %375 = vector.extract_strided_slice %357 {offsets = [0, 64], sizes = [8, 32], strides = [1, 1]} : vector<8x96xf32> to vector<8x32xf32>
    %376 = vector.extract_strided_slice %358 {offsets = [0, 64], sizes = [8, 32], strides = [1, 1]} : vector<8x96xf32> to vector<8x32xf32>
    %377 = arith.addf %376, %264 : vector<8x32xf32>
    %378 = arith.mulf %366, %377 : vector<8x32xf32>
    %379 = arith.addf %375, %378 : vector<8x32xf32>
    %380 = math.tanh %379 : vector<8x32xf32>
    %cst_90 = arith.constant 1.000000e+00 : f32
    %381 = vector.broadcast %cst_90 : f32 to vector<8x32xf32>
    %382 = arith.subf %381, %374 : vector<8x32xf32>
    %383 = arith.mulf %382, %380 : vector<8x32xf32>
    %384 = arith.mulf %374, %355 : vector<8x32xf32>
    %385 = arith.addf %383, %384 : vector<8x32xf32>
    %c24_91 = arith.constant 24 : index
    %c0_92 = arith.constant 0 : index
    %386 = vector.load %arg14[%c24_91, %c0_92] : memref<64x32xf32, #tpu.memory_space<vmem>>, vector<8x32xf32>
    tpu.vector_store %arg14[%c24_91, %c0_92], %385 {strides = array<i32>} : memref<64x32xf32, #tpu.memory_space<vmem>>, vector<8x32xf32>,
    %387 = vector.extract_strided_slice %262 {offsets = [32, 0], sizes = [8, 96], strides = [1, 1]} : vector<64x96xf32> to vector<8x96xf32>
    %cst_93 = arith.constant dense<0.000000e+00> : vector<8x96xf32>
    %388 = tpu.matmul %385, %257, %cst_93 {dimension_numbers = #tpu.dot_dimension_numbers<[1], [0], [0], [1], [0, 0, 1, 1], [], []>} : vector<8x32xf32>, vector<32x96xf32>, vector<8x96xf32> -> vector<8x96xf32>
    %389 = vector.extract_strided_slice %387 {offsets = [0, 0], sizes = [8, 32], strides = [1, 1]} : vector<8x96xf32> to vector<8x32xf32>
    %390 = vector.extract_strided_slice %388 {offsets = [0, 0], sizes = [8, 32], strides = [1, 1]} : vector<8x96xf32> to vector<8x32xf32>
    %391 = arith.addf %389, %390 : vector<8x32xf32>
    %392 = arith.negf %391 : vector<8x32xf32>
    %393 = math.exp %392 : vector<8x32xf32>
    %cst_94 = arith.constant 1.000000e+00 : f32
    %394 = vector.broadcast %cst_94 : f32 to vector<8x32xf32>
    %395 = arith.addf %394, %393 : vector<8x32xf32>
    %396 = arith.divf %394, %395 : vector<8x32xf32>
    %397 = vector.extract_strided_slice %387 {offsets = [0, 32], sizes = [8, 32], strides = [1, 1]} : vector<8x96xf32> to vector<8x32xf32>
    %398 = vector.extract_strided_slice %388 {offsets = [0, 32], sizes = [8, 32], strides = [1, 1]} : vector<8x96xf32> to vector<8x32xf32>
    %399 = arith.addf %397, %398 : vector<8x32xf32>
    %400 = arith.negf %399 : vector<8x32xf32>
    %401 = math.exp %400 : vector<8x32xf32>
    %cst_95 = arith.constant 1.000000e+00 : f32
    %402 = vector.broadcast %cst_95 : f32 to vector<8x32xf32>
    %403 = arith.addf %402, %401 : vector<8x32xf32>
    %404 = arith.divf %402, %403 : vector<8x32xf32>
    %405 = vector.extract_strided_slice %387 {offsets = [0, 64], sizes = [8, 32], strides = [1, 1]} : vector<8x96xf32> to vector<8x32xf32>
    %406 = vector.extract_strided_slice %388 {offsets = [0, 64], sizes = [8, 32], strides = [1, 1]} : vector<8x96xf32> to vector<8x32xf32>
    %407 = arith.addf %406, %264 : vector<8x32xf32>
    %408 = arith.mulf %396, %407 : vector<8x32xf32>
    %409 = arith.addf %405, %408 : vector<8x32xf32>
    %410 = math.tanh %409 : vector<8x32xf32>
    %cst_96 = arith.constant 1.000000e+00 : f32
    %411 = vector.broadcast %cst_96 : f32 to vector<8x32xf32>
    %412 = arith.subf %411, %404 : vector<8x32xf32>
    %413 = arith.mulf %412, %410 : vector<8x32xf32>
    %414 = arith.mulf %404, %385 : vector<8x32xf32>
    %415 = arith.addf %413, %414 : vector<8x32xf32>
    %c32_97 = arith.constant 32 : index
    %c0_98 = arith.constant 0 : index
    %416 = vector.load %arg14[%c32_97, %c0_98] : memref<64x32xf32, #tpu.memory_space<vmem>>, vector<8x32xf32>
    tpu.vector_store %arg14[%c32_97, %c0_98], %415 {strides = array<i32>} : memref<64x32xf32, #tpu.memory_space<vmem>>, vector<8x32xf32>,
    %417 = vector.extract_strided_slice %262 {offsets = [40, 0], sizes = [8, 96], strides = [1, 1]} : vector<64x96xf32> to vector<8x96xf32>
    %cst_99 = arith.constant dense<0.000000e+00> : vector<8x96xf32>
    %418 = tpu.matmul %415, %257, %cst_99 {dimension_numbers = #tpu.dot_dimension_numbers<[1], [0], [0], [1], [0, 0, 1, 1], [], []>} : vector<8x32xf32>, vector<32x96xf32>, vector<8x96xf32> -> vector<8x96xf32>
    %419 = vector.extract_strided_slice %417 {offsets = [0, 0], sizes = [8, 32], strides = [1, 1]} : vector<8x96xf32> to vector<8x32xf32>
    %420 = vector.extract_strided_slice %418 {offsets = [0, 0], sizes = [8, 32], strides = [1, 1]} : vector<8x96xf32> to vector<8x32xf32>
    %421 = arith.addf %419, %420 : vector<8x32xf32>
    %422 = arith.negf %421 : vector<8x32xf32>
    %423 = math.exp %422 : vector<8x32xf32>
    %cst_100 = arith.constant 1.000000e+00 : f32
    %424 = vector.broadcast %cst_100 : f32 to vector<8x32xf32>
    %425 = arith.addf %424, %423 : vector<8x32xf32>
    %426 = arith.divf %424, %425 : vector<8x32xf32>
    %427 = vector.extract_strided_slice %417 {offsets = [0, 32], sizes = [8, 32], strides = [1, 1]} : vector<8x96xf32> to vector<8x32xf32>
    %428 = vector.extract_strided_slice %418 {offsets = [0, 32], sizes = [8, 32], strides = [1, 1]} : vector<8x96xf32> to vector<8x32xf32>
    %429 = arith.addf %427, %428 : vector<8x32xf32>
    %430 = arith.negf %429 : vector<8x32xf32>
    %431 = math.exp %430 : vector<8x32xf32>
    %cst_101 = arith.constant 1.000000e+00 : f32
    %432 = vector.broadcast %cst_101 : f32 to vector<8x32xf32>
    %433 = arith.addf %432, %431 : vector<8x32xf32>
    %434 = arith.divf %432, %433 : vector<8x32xf32>
    %435 = vector.extract_strided_slice %417 {offsets = [0, 64], sizes = [8, 32], strides = [1, 1]} : vector<8x96xf32> to vector<8x32xf32>
    %436 = vector.extract_strided_slice %418 {offsets = [0, 64], sizes = [8, 32], strides = [1, 1]} : vector<8x96xf32> to vector<8x32xf32>
    %437 = arith.addf %436, %264 : vector<8x32xf32>
    %438 = arith.mulf %426, %437 : vector<8x32xf32>
    %439 = arith.addf %435, %438 : vector<8x32xf32>
    %440 = math.tanh %439 : vector<8x32xf32>
    %cst_102 = arith.constant 1.000000e+00 : f32
    %441 = vector.broadcast %cst_102 : f32 to vector<8x32xf32>
    %442 = arith.subf %441, %434 : vector<8x32xf32>
    %443 = arith.mulf %442, %440 : vector<8x32xf32>
    %444 = arith.mulf %434, %415 : vector<8x32xf32>
    %445 = arith.addf %443, %444 : vector<8x32xf32>
    %c40_103 = arith.constant 40 : index
    %c0_104 = arith.constant 0 : index
    %446 = vector.load %arg14[%c40_103, %c0_104] : memref<64x32xf32, #tpu.memory_space<vmem>>, vector<8x32xf32>
    tpu.vector_store %arg14[%c40_103, %c0_104], %445 {strides = array<i32>} : memref<64x32xf32, #tpu.memory_space<vmem>>, vector<8x32xf32>,
    %447 = vector.extract_strided_slice %262 {offsets = [48, 0], sizes = [8, 96], strides = [1, 1]} : vector<64x96xf32> to vector<8x96xf32>
    %cst_105 = arith.constant dense<0.000000e+00> : vector<8x96xf32>
    %448 = tpu.matmul %445, %257, %cst_105 {dimension_numbers = #tpu.dot_dimension_numbers<[1], [0], [0], [1], [0, 0, 1, 1], [], []>} : vector<8x32xf32>, vector<32x96xf32>, vector<8x96xf32> -> vector<8x96xf32>
    %449 = vector.extract_strided_slice %447 {offsets = [0, 0], sizes = [8, 32], strides = [1, 1]} : vector<8x96xf32> to vector<8x32xf32>
    %450 = vector.extract_strided_slice %448 {offsets = [0, 0], sizes = [8, 32], strides = [1, 1]} : vector<8x96xf32> to vector<8x32xf32>
    %451 = arith.addf %449, %450 : vector<8x32xf32>
    %452 = arith.negf %451 : vector<8x32xf32>
    %453 = math.exp %452 : vector<8x32xf32>
    %cst_106 = arith.constant 1.000000e+00 : f32
    %454 = vector.broadcast %cst_106 : f32 to vector<8x32xf32>
    %455 = arith.addf %454, %453 : vector<8x32xf32>
    %456 = arith.divf %454, %455 : vector<8x32xf32>
    %457 = vector.extract_strided_slice %447 {offsets = [0, 32], sizes = [8, 32], strides = [1, 1]} : vector<8x96xf32> to vector<8x32xf32>
    %458 = vector.extract_strided_slice %448 {offsets = [0, 32], sizes = [8, 32], strides = [1, 1]} : vector<8x96xf32> to vector<8x32xf32>
    %459 = arith.addf %457, %458 : vector<8x32xf32>
    %460 = arith.negf %459 : vector<8x32xf32>
    %461 = math.exp %460 : vector<8x32xf32>
    %cst_107 = arith.constant 1.000000e+00 : f32
    %462 = vector.broadcast %cst_107 : f32 to vector<8x32xf32>
    %463 = arith.addf %462, %461 : vector<8x32xf32>
    %464 = arith.divf %462, %463 : vector<8x32xf32>
    %465 = vector.extract_strided_slice %447 {offsets = [0, 64], sizes = [8, 32], strides = [1, 1]} : vector<8x96xf32> to vector<8x32xf32>
    %466 = vector.extract_strided_slice %448 {offsets = [0, 64], sizes = [8, 32], strides = [1, 1]} : vector<8x96xf32> to vector<8x32xf32>
    %467 = arith.addf %466, %264 : vector<8x32xf32>
    %468 = arith.mulf %456, %467 : vector<8x32xf32>
    %469 = arith.addf %465, %468 : vector<8x32xf32>
    %470 = math.tanh %469 : vector<8x32xf32>
    %cst_108 = arith.constant 1.000000e+00 : f32
    %471 = vector.broadcast %cst_108 : f32 to vector<8x32xf32>
    %472 = arith.subf %471, %464 : vector<8x32xf32>
    %473 = arith.mulf %472, %470 : vector<8x32xf32>
    %474 = arith.mulf %464, %445 : vector<8x32xf32>
    %475 = arith.addf %473, %474 : vector<8x32xf32>
    %c48_109 = arith.constant 48 : index
    %c0_110 = arith.constant 0 : index
    %476 = vector.load %arg14[%c48_109, %c0_110] : memref<64x32xf32, #tpu.memory_space<vmem>>, vector<8x32xf32>
    tpu.vector_store %arg14[%c48_109, %c0_110], %475 {strides = array<i32>} : memref<64x32xf32, #tpu.memory_space<vmem>>, vector<8x32xf32>,
    %477 = vector.extract_strided_slice %262 {offsets = [56, 0], sizes = [8, 96], strides = [1, 1]} : vector<64x96xf32> to vector<8x96xf32>
    %cst_111 = arith.constant dense<0.000000e+00> : vector<8x96xf32>
    %478 = tpu.matmul %475, %257, %cst_111 {dimension_numbers = #tpu.dot_dimension_numbers<[1], [0], [0], [1], [0, 0, 1, 1], [], []>} : vector<8x32xf32>, vector<32x96xf32>, vector<8x96xf32> -> vector<8x96xf32>
    %479 = vector.extract_strided_slice %477 {offsets = [0, 0], sizes = [8, 32], strides = [1, 1]} : vector<8x96xf32> to vector<8x32xf32>
    %480 = vector.extract_strided_slice %478 {offsets = [0, 0], sizes = [8, 32], strides = [1, 1]} : vector<8x96xf32> to vector<8x32xf32>
    %481 = arith.addf %479, %480 : vector<8x32xf32>
    %482 = arith.negf %481 : vector<8x32xf32>
    %483 = math.exp %482 : vector<8x32xf32>
    %cst_112 = arith.constant 1.000000e+00 : f32
    %484 = vector.broadcast %cst_112 : f32 to vector<8x32xf32>
    %485 = arith.addf %484, %483 : vector<8x32xf32>
    %486 = arith.divf %484, %485 : vector<8x32xf32>
    %487 = vector.extract_strided_slice %477 {offsets = [0, 32], sizes = [8, 32], strides = [1, 1]} : vector<8x96xf32> to vector<8x32xf32>
    %488 = vector.extract_strided_slice %478 {offsets = [0, 32], sizes = [8, 32], strides = [1, 1]} : vector<8x96xf32> to vector<8x32xf32>
    %489 = arith.addf %487, %488 : vector<8x32xf32>
    %490 = arith.negf %489 : vector<8x32xf32>
    %491 = math.exp %490 : vector<8x32xf32>
    %cst_113 = arith.constant 1.000000e+00 : f32
    %492 = vector.broadcast %cst_113 : f32 to vector<8x32xf32>
    %493 = arith.addf %492, %491 : vector<8x32xf32>
    %494 = arith.divf %492, %493 : vector<8x32xf32>
    %495 = vector.extract_strided_slice %477 {offsets = [0, 64], sizes = [8, 32], strides = [1, 1]} : vector<8x96xf32> to vector<8x32xf32>
    %496 = vector.extract_strided_slice %478 {offsets = [0, 64], sizes = [8, 32], strides = [1, 1]} : vector<8x96xf32> to vector<8x32xf32>
    %497 = arith.addf %496, %264 : vector<8x32xf32>
    %498 = arith.mulf %486, %497 : vector<8x32xf32>
    %499 = arith.addf %495, %498 : vector<8x32xf32>
    %500 = math.tanh %499 : vector<8x32xf32>
    %cst_114 = arith.constant 1.000000e+00 : f32
    %501 = vector.broadcast %cst_114 : f32 to vector<8x32xf32>
    %502 = arith.subf %501, %494 : vector<8x32xf32>
    %503 = arith.mulf %502, %500 : vector<8x32xf32>
    %504 = arith.mulf %494, %475 : vector<8x32xf32>
    %505 = arith.addf %503, %504 : vector<8x32xf32>
    %c56_115 = arith.constant 56 : index
    %c0_116 = arith.constant 0 : index
    %506 = vector.load %arg14[%c56_115, %c0_116] : memref<64x32xf32, #tpu.memory_space<vmem>>, vector<8x32xf32>
    tpu.vector_store %arg14[%c56_115, %c0_116], %505 {strides = array<i32>} : memref<64x32xf32, #tpu.memory_space<vmem>>, vector<8x32xf32>,
    %c1_117 = arith.constant 1 : index
    %c0_118 = arith.constant 0 : index
    %c0_119 = arith.constant 0 : index
    %507 = vector.load %arg13[%c1_117, %c0_118, %c0_119] : memref<2x8x32xf32, #tpu.memory_space<vmem>>, vector<1x8x32xf32>
    %508 = vector.shape_cast %507 : vector<1x8x32xf32> to vector<8x32xf32>
    %509 = vector.shape_cast %505 : vector<8x32xf32> to vector<1x8x32xf32>
    tpu.vector_store %arg13[%c1_117, %c0_118, %c0_119], %509 {strides = array<i32>} : memref<2x8x32xf32, #tpu.memory_space<vmem>>, vector<1x8x32xf32>,
    %c0_120 = arith.constant 0 : index
    %c0_121 = arith.constant 0 : index
    %510 = vector.load %arg14[%c0_120, %c0_121] : memref<64x32xf32, #tpu.memory_space<vmem>>, vector<64x32xf32>
    %c0_122 = arith.constant 0 : index
    %c0_123 = arith.constant 0 : index
    %511 = vector.load %arg10[%c0_122, %c0_123] : memref<32x128xf32, #tpu.memory_space<vmem>>, vector<32x128xf32>
    %cst_124 = arith.constant dense<0.000000e+00> : vector<64x128xf32>
    %512 = tpu.matmul %510, %511, %cst_124 {dimension_numbers = #tpu.dot_dimension_numbers<[1], [0], [0], [1], [0, 0, 1, 1], [], []>} : vector<64x32xf32>, vector<32x128xf32>, vector<64x128xf32> -> vector<64x128xf32>
    %c0_125 = arith.constant 0 : index
    %c0_126 = arith.constant 0 : index
    %513 = vector.load %arg11[%c0_125, %c0_126] : memref<1x128xf32, #tpu.memory_space<vmem>>, vector<1x128xf32>
    %514 = vector.broadcast %513 : vector<1x128xf32> to vector<64x128xf32>
    %515 = arith.addf %512, %514 : vector<64x128xf32>
    %c0_127 = arith.constant 0 : index
    %c0_128 = arith.constant 0 : index
    %516 = vector.load %arg12[%c0_127, %c0_128] : memref<64x128xf32, #tpu.memory_space<vmem>>, vector<64x128xf32>
    tpu.vector_store %arg12[%c0_127, %c0_128], %515 {strides = array<i32>} : memref<64x128xf32, #tpu.memory_space<vmem>>, vector<64x128xf32>,
    return
  }
}

</mosaic_0001>

<llo_original>
// kernel: tpu_custom_call.1
$region0: #{tpu_custom_call.1}
  #allocation0 [shape = 'u32[]', space=smem, size = 0x4, offset = 0x4, fixed_abs, tag = 'smem constant byte address 0x4 - core index']
  #allocation1 [shape = 'u32[72,128]{1,0:T(1,128)}', space=vmem, size = 0x9000, scoped, tag = 'internal scratch']
  #allocation2 [shape = 'f32[64,32]{1,0:T(8,128)}', space=vmem, size = 0x8000, scoped, tag = 'scratch operand']
  %s0 = inlined_call_operand.vmem [shape: f32[64,4], index: 0, kind: input, shape index: {}]
  %s1 = inlined_call_operand.hbm [shape: f32[2,8,32], index: 1, kind: input, shape index: {}, may-alias: {1,13}]
  %s2 = inlined_call_operand.vmem [shape: f32[4,96], index: 2, kind: input, shape index: {}]
  %s3 = inlined_call_operand.vmem [shape: f32[32,96], index: 3, kind: input, shape index: {}]
  %s4 = inlined_call_operand.vmem [shape: f32[1,96], index: 4, kind: input, shape index: {}]
  %s5 = inlined_call_operand.hbm [shape: f32[1,32], index: 5, kind: input, shape index: {}]
  %s6 = inlined_call_operand.vmem [shape: f32[32,96], index: 6, kind: input, shape index: {}]
  %s7 = inlined_call_operand.vmem [shape: f32[32,96], index: 7, kind: input, shape index: {}]
  %s8 = inlined_call_operand.hbm [shape: f32[1,96], index: 8, kind: input, shape index: {}]
  %s9 = inlined_call_operand.hbm [shape: f32[1,32], index: 9, kind: input, shape index: {}]
  %s10 = inlined_call_operand.hbm [shape: f32[32,128], index: 10, kind: input, shape index: {}]
  %s11 = inlined_call_operand.hbm [shape: f32[1,128], index: 11, kind: input, shape index: {}]
  %s12 = inlined_call_operand.hbm [shape: f32[64,128], index: 12, kind: output, shape index: {0}]
  %s13 = inlined_call_operand.hbm [shape: f32[2,8,32], index: 13, kind: output, shape index: {1}, may-alias: {1,13}]
  %14 = xla_tuple %s12, %s13
  %s15 = sld [smem:[#allocation0]]
  $region90: #{tpu_custom_call.1} parent=0
    _
  %s17 = ssub.s32 1, %s15
  %s18 = scalar_select 0, %s17, %s15
  $region1: #{tpu_custom_call.1} parent=0
    #allocation3 [shape = 'u8[8192]{0}', space=vmem, size = 0x2000, scoped, tag = 'input window, operand 1, single buffered']
    #allocation4 [shape = 's32[1]{0}', space=sflag, size = 0x4, scoped, tag = 'scoped memory for tpu_custom_call.1']
    #allocation5 [shape = 's32[1]{0}', space=sflag, size = 0x4, scoped, tag = 'scoped memory for tpu_custom_call.1']
    #allocation6 [shape = 'u8[512]{0}', space=vmem, size = 0x400, scoped, tag = 'input window, operand 5, single buffered']
    #allocation7 [shape = 's32[1]{0}', space=sflag, size = 0x4, scoped, tag = 'scoped memory for tpu_custom_call.1']
    #allocation8 [shape = 'u8[512]{0}', space=vmem, size = 0x400, scoped, tag = 'input window, operand 8, single buffered']
    #allocation9 [shape = 'u8[512]{0}', space=vmem, size = 0x400, scoped, tag = 'input window, operand 9, single buffered']
    #allocation10 [shape = 's32[1]{0}', space=sflag, size = 0x4, scoped, tag = 'scoped memory for tpu_custom_call.1']
    #allocation11 [shape = 'u8[16384]{0}', space=vmem, size = 0x4000, scoped, tag = 'input window, operand 10, single buffered']
    #allocation12 [shape = 'u8[512]{0}', space=vmem, size = 0x400, scoped, tag = 'input window, operand 11, single buffered']
    #allocation13 [shape = 's32[1]{0}', space=sflag, size = 0x4, scoped, tag = 'scoped memory for tpu_custom_call.1']
    #allocation14 [shape = 'u8[32768]{0}', space=vmem, size = 0x8000, scoped, tag = 'output window, operand 0, single buffered']
    #allocation15 [shape = 'u8[8192]{0}', space=vmem, size = 0x2000, scoped, tag = 'output window, operand 1, single buffered']
    #allocation16 [shape = 's32[1]{0}', space=sflag, size = 0x4, scoped, tag = 'scoped memory for tpu_custom_call.1']
    %19 = vsyncpa [#allocation4], 0
    %20 = vsyncpa [#allocation7], 0
    %21 = vsyncpa [#allocation10], 0
    %22 = vsyncpa [#allocation13], 0
    %23 = vsyncpa [#allocation5], 0
    %24 = vsyncpa [#allocation16], 0
    // Predicated region
    $region2: #{tpu_custom_call.1} parent=1 // pred_check
      _
    $region3: #{tpu_custom_call.1} parent=1 // pred_check_branch
      %26 = sbr.rel (0) target = $region5
    $region4: #{tpu_custom_call.1} parent=1 // pred_region
      _
    $region5: #{tpu_custom_call.1} parent=1 // pred_fallthru
      _
    // Predicated region
    $region6: #{tpu_custom_call.1} parent=1 // pred_check
      _
    $region7: #{tpu_custom_call.1} parent=1 // pred_check_branch
      %28 = sbr.rel (0) target = $region9
    $region8: #{tpu_custom_call.1} parent=1 // pred_region
      %30 = vsyncadd [#allocation4], 0
      %s31 = sshll.u32 %s1, 4
      %s32 = int_to_ptr.hbm [resolvable:$true] %s31
      %s33 = sshll.u32 [#allocation3], 4
      %s34 = int_to_ptr.vmem [resolvable:$true] %s33
      %39 = dma.hbm_to_vmem [thread:$0]  %s32, 256, %s34, [#allocation4], 128, 128, 8
    $region9: #{tpu_custom_call.1} parent=1 // pred_fallthru
      _
    // Predicated region
    $region10: #{tpu_custom_call.1} parent=1 // pred_check
      _
    $region11: #{tpu_custom_call.1} parent=1 // pred_check_branch
      %41 = sbr.rel (0) target = $region13
    $region12: #{tpu_custom_call.1} parent=1 // pred_region
      _
    $region13: #{tpu_custom_call.1} parent=1 // pred_fallthru
      _
    // Predicated region
    $region14: #{tpu_custom_call.1} parent=1 // pred_check
      _
    $region15: #{tpu_custom_call.1} parent=1 // pred_check_branch
      %43 = sbr.rel (0) target = $region17
    $region16: #{tpu_custom_call.1} parent=1 // pred_region
      _
    $region17: #{tpu_custom_call.1} parent=1 // pred_fallthru
      _
    // Predicated region
    $region18: #{tpu_custom_call.1} parent=1 // pred_check
      _
    $region19: #{tpu_custom_call.1} parent=1 // pred_check_branch
      %45 = sbr.rel (0) target = $region21
    $region20: #{tpu_custom_call.1} parent=1 // pred_region
      _
    $region21: #{tpu_custom_call.1} parent=1 // pred_fallthru
      _
    // Predicated region
    $region22: #{tpu_custom_call.1} parent=1 // pred_check
      _
    $region23: #{tpu_custom_call.1} parent=1 // pred_check_branch
      %47 = sbr.rel (0) target = $region25
    $region24: #{tpu_custom_call.1} parent=1 // pred_region
      %49 = vsyncadd [#allocation7], 0
      %s51 = sshll.u32 %s5, 4
      %s52 = int_to_ptr.hbm [resolvable:$true] %s51
      %s53 = sshll.u32 [#allocation6], 4
      %s54 = int_to_ptr.vmem [resolvable:$true] %s53
      %56 = dma.hbm_to_vmem [thread:$0]  %s52, 16, %s54, [#allocation7]
    $region25: #{tpu_custom_call.1} parent=1 // pred_fallthru
      _
    // Predicated region
    $region26: #{tpu_custom_call.1} parent=1 // pred_check
      _
    $region27: #{tpu_custom_call.1} parent=1 // pred_check_branch
      %58 = sbr.rel (0) target = $region29
    $region28: #{tpu_custom_call.1} parent=1 // pred_region
      _
    $region29: #{tpu_custom_call.1} parent=1 // pred_fallthru
      _
    // Predicated region
    $region30: #{tpu_custom_call.1} parent=1 // pred_check
      _
    $region31: #{tpu_custom_call.1} parent=1 // pred_check_branch
      %60 = sbr.rel (0) target = $region33
    $region32: #{tpu_custom_call.1} parent=1 // pred_region
      _
    $region33: #{tpu_custom_call.1} parent=1 // pred_fallthru
      _
    // Predicated region
    $region34: #{tpu_custom_call.1} parent=1 // pred_check
      _
    $region35: #{tpu_custom_call.1} parent=1 // pred_check_branch
      %62 = sbr.rel (0) target = $region37
    $region36: #{tpu_custom_call.1} parent=1 // pred_region
      %64 = vsyncadd [#allocation7], 0
      %s66 = sshll.u32 %s8, 4
      %s67 = int_to_ptr.hbm [resolvable:$true] %s66
      %s68 = sshll.u32 [#allocation8], 4
      %s69 = int_to_ptr.vmem [resolvable:$true] %s68
      %71 = dma.hbm_to_vmem [thread:$0]  %s67, 16, %s69, [#allocation7]
    $region37: #{tpu_custom_call.1} parent=1 // pred_fallthru
      _
    // Predicated region
    $region38: #{tpu_custom_call.1} parent=1 // pred_check
      _
    $region39: #{tpu_custom_call.1} parent=1 // pred_check_branch
      %73 = sbr.rel (0) target = $region41
    $region40: #{tpu_custom_call.1} parent=1 // pred_region
      %75 = vsyncadd [#allocation10], 0
      %s77 = sshll.u32 %s9, 4
      %s78 = int_to_ptr.hbm [resolvable:$true] %s77
      %s79 = sshll.u32 [#allocation9], 4
      %s80 = int_to_ptr.vmem [resolvable:$true] %s79
      %82 = dma.hbm_to_vmem [thread:$0]  %s78, 16, %s80, [#allocation10]
    $region41: #{tpu_custom_call.1} parent=1 // pred_fallthru
      _
    // Predicated region
    $region42: #{tpu_custom_call.1} parent=1 // pred_check
      _
    $region43: #{tpu_custom_call.1} parent=1 // pred_check_branch
      %84 = sbr.rel (0) target = $region45
    $region44: #{tpu_custom_call.1} parent=1 // pred_region
      %86 = vsyncadd [#allocation10], 0
      %s87 = sshll.u32 %s10, 4
      %s88 = int_to_ptr.hbm [resolvable:$true] %s87
      %s89 = sshll.u32 [#allocation11], 4
      %s90 = int_to_ptr.vmem [resolvable:$true] %s89
      %95 = dma.hbm_to_vmem [thread:$0]  %s88, 512, %s90, [#allocation10], 128, 128, 8
    $region45: #{tpu_custom_call.1} parent=1 // pred_fallthru
      _
    // Predicated region
    $region46: #{tpu_custom_call.1} parent=1 // pred_check
      _
    $region47: #{tpu_custom_call.1} parent=1 // pred_check_branch
      %97 = sbr.rel (0) target = $region49
    $region48: #{tpu_custom_call.1} parent=1 // pred_region
      %99 = vsyncadd [#allocation13], 0
      %s101 = sshll.u32 %s11, 4
      %s102 = int_to_ptr.hbm [resolvable:$true] %s101
      %s103 = sshll.u32 [#allocation12], 4
      %s104 = int_to_ptr.vmem [resolvable:$true] %s103
      %106 = dma.hbm_to_vmem [thread:$0]  %s102, 16, %s104, [#allocation13]
    $region49: #{tpu_custom_call.1} parent=1 // pred_fallthru
      _
    // Predicated region
    $region50: #{tpu_custom_call.1} parent=1 // pred_check
      _
    $region51: #{tpu_custom_call.1} parent=1 // pred_check_branch
      %108 = sbr.rel (0) target = $region53
    $region52: #{tpu_custom_call.1} parent=1 // pred_region
      %110 = dma.done [#allocation4], 256
    $region53: #{tpu_custom_call.1} parent=1 // pred_fallthru
      _
    // Predicated region
    $region54: #{tpu_custom_call.1} parent=1 // pred_check
      _
    $region55: #{tpu_custom_call.1} parent=1 // pred_check_branch
      %112 = sbr.rel (0) target = $region57
    $region56: #{tpu_custom_call.1} parent=1 // pred_region
      %114 = dma.done [#allocation7], 16
    $region57: #{tpu_custom_call.1} parent=1 // pred_fallthru
      _
    // Predicated region
    $region58: #{tpu_custom_call.1} parent=1 // pred_check
      _
    $region59: #{tpu_custom_call.1} parent=1 // pred_check_branch
      %116 = sbr.rel (0) target = $region61
    $region60: #{tpu_custom_call.1} parent=1 // pred_region
      %118 = dma.done [#allocation7], 16
    $region61: #{tpu_custom_call.1} parent=1 // pred_fallthru
      _
    // Predicated region
    $region62: #{tpu_custom_call.1} parent=1 // pred_check
      _
    $region63: #{tpu_custom_call.1} parent=1 // pred_check_branch
      %120 = sbr.rel (0) target = $region65
    $region64: #{tpu_custom_call.1} parent=1 // pred_region
      %122 = dma.done [#allocation10], 16
    $region65: #{tpu_custom_call.1} parent=1 // pred_fallthru
      _
    // Predicated region
    $region66: #{tpu_custom_call.1} parent=1 // pred_check
      _
    $region67: #{tpu_custom_call.1} parent=1 // pred_check_branch
      %124 = sbr.rel (0) target = $region69
    $region68: #{tpu_custom_call.1} parent=1 // pred_region
      %126 = dma.done [#allocation10], 512
    $region69: #{tpu_custom_call.1} parent=1 // pred_fallthru
      _
    // Predicated region
    $region70: #{tpu_custom_call.1} parent=1 // pred_check
      _
    $region71: #{tpu_custom_call.1} parent=1 // pred_check_branch
      %128 = sbr.rel (0) target = $region73
    $region72: #{tpu_custom_call.1} parent=1 // pred_region
      %130 = dma.done [#allocation13], 16
    $region73: #{tpu_custom_call.1} parent=1 // pred_fallthru
      _
    %v131 = vld [vmem:[%s0] sm:$0xff]
    %v132 = vld [vmem:[%s0 + $0x8] sm:$0xff]
    %v133 = vld [vmem:[%s0 + $0x10] sm:$0xff]
    %v134 = vld [vmem:[%s0 + $0x18] sm:$0xff]
    %v135 = vld [vmem:[%s0 + $0x20] sm:$0xff]
    %v136 = vld [vmem:[%s0 + $0x28] sm:$0xff]
    %v137 = vld [vmem:[%s0 + $0x30] sm:$0xff]
    %v138 = vld [vmem:[%s0 + $0x38] sm:$0xff]
    %v139 = vld [vmem:[%s2] sm:$0xf]
    %v140 = vld [vmem:[%s3] sm:$0xff]
    %v141 = vld [vmem:[%s3 + $0x8] sm:$0xff]
    %v142 = vld [vmem:[%s3 + $0x10] sm:$0xff]
    %v143 = vld [vmem:[%s3 + $0x18] sm:$0xff]
    %v144 = vld [vmem:[%s4] sm:$0x1]
    %v145 = vld [vmem:[#allocation6] sm:$0x1]
    %v147 = vperm.slane %v144, 0
    %vm149 = vcmask 31744
    %v151 = vsel %vm149, %v131, 0
    %v154 = vsel %vm149, %v132, 0
    %v157 = vsel %vm149, %v133, 0
    %v160 = vsel %vm149, %v134, 0
    %v163 = vsel %vm149, %v135, 0
    %v166 = vsel %vm149, %v136, 0
    %v169 = vsel %vm149, %v137, 0
    %v172 = vsel %vm149, %v138, 0
    %vm174 = vcmask 1043456
    %v176 = vsel %vm174, %v139, 0
    %178 = vmatpush.msra.mxu0 0.0
    %179 = vmatpush.msra.mxu0 0.0
    %180 = vmatpush.msra.mxu0 0.0
    %181 = vmatpush.msra.mxu0 0.0
    %182 = vmatpush.msra.mxu0 0.0
    %183 = vmatpush.msra.mxu0 0.0
    %184 = vmatpush.msra.mxu0 0.0
    %185 = vmatpush.msra.mxu0 0.0
    %186 = vmatpush.msra.mxu0 0.0
    %187 = vmatpush.msra.mxu0 0.0
    %188 = vmatpush.msra.mxu0 0.0
    %189 = vmatpush.msra.mxu0 0.0
    %190 = vmatpush.msra.mxu0 0.0
    %191 = vmatpush.msra.mxu0 0.0
    %192 = vmatpush.msra.mxu0 0.0
    %193 = vmatpush.msra.mxu0 %v176
    %194 = vmatmul.f32.gmra.mxu0 %v151
    %v195 = vpop.f32.mrf.mxu0
    %v196 = vadd.f32 %v147, %v195
    %197 = vmatmul.f32.gmra.mxu0 %v154
    %v198 = vpop.f32.mrf.mxu0
    %v199 = vadd.f32 %v147, %v198
    %200 = vmatmul.f32.gmra.mxu0 %v157
    %v201 = vpop.f32.mrf.mxu0
    %v202 = vadd.f32 %v147, %v201
    %203 = vmatmul.f32.gmra.mxu0 %v160
    %v204 = vpop.f32.mrf.mxu0
    %v205 = vadd.f32 %v147, %v204
    %206 = vmatmul.f32.gmra.mxu0 %v163
    %v207 = vpop.f32.mrf.mxu0
    %v208 = vadd.f32 %v147, %v207
    %209 = vmatmul.f32.gmra.mxu0 %v166
    %v210 = vpop.f32.mrf.mxu0
    %v211 = vadd.f32 %v147, %v210
    %212 = vmatmul.f32.gmra.mxu0 %v169
    %v213 = vpop.f32.mrf.mxu0
    %v214 = vadd.f32 %v147, %v213
    %215 = vmatmul.f32.gmra.mxu0 %v172
    %v216 = vpop.f32.mrf.mxu0
    %v217 = vadd.f32 %v147, %v216
    %218 = vdwg.mxu0
    %v220 = vperm.slane %v145, 0
    %v221 = vld [vmem:[#allocation3] sm:$0xff]
    %vm222 = vcmask 261120
    %v224 = vsel %vm222, %v221, 0
    %226 = vmatpush.msra.mxu0 0.0
    %227 = vmatpush.msra.mxu0 0.0
    %228 = vmatpush.msra.mxu0 0.0
    %229 = vmatpush.msra.mxu0 0.0
    %230 = vmatpush.msra.mxu0 0.0
    %231 = vmatpush.msra.mxu0 0.0
    %232 = vmatpush.msra.mxu0 0.0
    %233 = vmatpush.msra.mxu0 0.0
    %234 = vmatpush.msra.mxu0 0.0
    %235 = vmatpush.msra.mxu0 0.0
    %236 = vmatpush.msra.mxu0 0.0
    %237 = vmatpush.msra.mxu0 0.0
    %238 = vmatpush.msra.mxu0 %v143
    %239 = vmatpush.msra.mxu0 %v142
    %240 = vmatpush.msra.mxu0 %v141
    %241 = vmatpush.msra.mxu0 %v140
    %242 = vmatmul.f32.gmra.mxu0 %v224
    %v243 = vpop.f32.mrf.mxu0
    %v244 = vadd.f32 0.0, %v243
    %245 = vdwg.mxu0
    %v246 = vadd.f32 %v196, %v244
    %v247 = vxor.u32 %v246, 2147483648
    %v248 = vmul.f32 %v247, 1.442695
    %v249 = vpow.pop %v248
    %v250 = vadd.f32 %v249, 1.0
    %v251 = vrcp.pop %v250
    %v252 = vmul.f32 %v250, %v251
    %v253 = vsub.f32 1.0, %v252
    %v254 = vmul.f32 %v251, %v253
    %v255 = vadd.f32 %v251, %v254
    %vm256 = vweird.f32 %v250
    %vm257 = vweird.f32 %v251
    %vm258 = vmor %vm256, %vm257
    %v259 = vsel %vm258, %v251, %v255
    %v260 = vand.u32 2147483647, %v250
    %vm261 = vcmp.eq.f32.partialorder %v260, 8.507059e+37
    %v262 = vand.u32 %v250, 2147483648
    %v263 = vor.u32 1.1754944e-38, %v262
    %v264 = vsel %vm261, %v263, %v259
    %v265 = vmul.f32 1.0, %v264
    %266 = vrot.lane.b32.xlu0 %v220, 64
    %v267 = vpop.permute.xlu0 %266
    %v269 = vadd.f32 %v244, %v267
    %271 = vrot.lane.b32.xlu0 %v269, 64
    %v272 = vpop.permute.xlu0 %271
    %v274 = vmul.f32 %v265, %v272
    %276 = vrot.lane.b32.xlu0 %v274, 64
    %v277 = vpop.permute.xlu0 %276
    %v279 = vadd.f32 %v196, %v277
    %v280 = vtanh.pop %v279
    %v281 = vsub.f32 1.0, %v265
    %283 = vrot.lane.b32.xlu0 %v280, 96
    %v284 = vpop.permute.xlu0 %283
    %v286 = vmul.f32 %v281, %v284
    %287 = vrot.lane.b32.xlu0 %v221, 32
    %v288 = vpop.permute.xlu0 %287
    %v290 = vmul.f32 %v265, %v288
    %v291 = vadd.f32 %v286, %v290
    %293 = vrot.lane.b32.xlu0 %v291, 96
    %v294 = vpop.permute.xlu0 %293
    %296 = vst.msk [vmem:[#allocation2] sm:$0xff] %vm222, %v294
    %v297 = vsel %vm222, %v294, 0
    %299 = vmatpush.msra.mxu0 0.0
    %300 = vmatpush.msra.mxu0 0.0
    %301 = vmatpush.msra.mxu0 0.0
    %302 = vmatpush.msra.mxu0 0.0
    %303 = vmatpush.msra.mxu0 0.0
    %304 = vmatpush.msra.mxu0 0.0
    %305 = vmatpush.msra.mxu0 0.0
    %306 = vmatpush.msra.mxu0 0.0
    %307 = vmatpush.msra.mxu0 0.0
    %308 = vmatpush.msra.mxu0 0.0
    %309 = vmatpush.msra.mxu0 0.0
    %310 = vmatpush.msra.mxu0 0.0
    %311 = vmatpush.msra.mxu0 %v143
    %312 = vmatpush.msra.mxu0 %v142
    %313 = vmatpush.msra.mxu0 %v141
    %314 = vmatpush.msra.mxu0 %v140
    %315 = vmatmul.f32.gmra.mxu0 %v297
    %v316 = vpop.f32.mrf.mxu0
    %v317 = vadd.f32 0.0, %v316
    %318 = vdwg.mxu0
    %v319 = vadd.f32 %v199, %v317
    %v320 = vxor.u32 %v319, 2147483648
    %v321 = vmul.f32 %v320, 1.442695
    %v322 = vpow.pop %v321
    %v323 = vadd.f32 %v322, 1.0
    %v324 = vrcp.pop %v323
    %v325 = vmul.f32 %v323, %v324
    %v326 = vsub.f32 1.0, %v325
    %v327 = vmul.f32 %v324, %v326
    %v328 = vadd.f32 %v324, %v327
    %vm329 = vweird.f32 %v323
    %vm330 = vweird.f32 %v324
    %vm331 = vmor %vm329, %vm330
    %v332 = vsel %vm331, %v324, %v328
    %v333 = vand.u32 2147483647, %v323
    %vm334 = vcmp.eq.f32.partialorder %v333, 8.507059e+37
    %v335 = vand.u32 %v323, 2147483648
    %v336 = vor.u32 1.1754944e-38, %v335
    %v337 = vsel %vm334, %v336, %v332
    %v338 = vmul.f32 1.0, %v337
    %v339 = vadd.f32 %v317, %v267
    %341 = vrot.lane.b32.xlu0 %v339, 64
    %v342 = vpop.permute.xlu0 %341
    %v344 = vmul.f32 %v338, %v342
    %346 = vrot.lane.b32.xlu0 %v344, 64
    %v347 = vpop.permute.xlu0 %346
    %v349 = vadd.f32 %v199, %v347
    %v350 = vtanh.pop %v349
    %v351 = vsub.f32 1.0, %v338
    %353 = vrot.lane.b32.xlu0 %v350, 96
    %v354 = vpop.permute.xlu0 %353
    %v356 = vmul.f32 %v351, %v354
    %v357 = vmul.f32 %v338, %v291
    %v358 = vadd.f32 %v356, %v357
    %360 = vrot.lane.b32.xlu0 %v358, 96
    %v361 = vpop.permute.xlu0 %360
    %363 = vst.msk [vmem:[#allocation2 + $0x8] sm:$0xff] %vm222, %v361
    %v364 = vsel %vm222, %v361, 0
    %366 = vmatpush.msra.mxu0 0.0
    %367 = vmatpush.msra.mxu0 0.0
    %368 = vmatpush.msra.mxu0 0.0
    %369 = vmatpush.msra.mxu0 0.0
    %370 = vmatpush.msra.mxu0 0.0
    %371 = vmatpush.msra.mxu0 0.0
    %372 = vmatpush.msra.mxu0 0.0
    %373 = vmatpush.msra.mxu0 0.0
    %374 = vmatpush.msra.mxu0 0.0
    %375 = vmatpush.msra.mxu0 0.0
    %376 = vmatpush.msra.mxu0 0.0
    %377 = vmatpush.msra.mxu0 0.0
    %378 = vmatpush.msra.mxu0 %v143
    %379 = vmatpush.msra.mxu0 %v142
    %380 = vmatpush.msra.mxu0 %v141
    %381 = vmatpush.msra.mxu0 %v140
    %382 = vmatmul.f32.gmra.mxu0 %v364
    %v383 = vpop.f32.mrf.mxu0
    %v384 = vadd.f32 0.0, %v383
    %385 = vdwg.mxu0
    %v386 = vadd.f32 %v202, %v384
    %v387 = vxor.u32 %v386, 2147483648
    %v388 = vmul.f32 %v387, 1.442695
    %v389 = vpow.pop %v388
    %v390 = vadd.f32 %v389, 1.0
    %v391 = vrcp.pop %v390
    %v392 = vmul.f32 %v390, %v391
    %v393 = vsub.f32 1.0, %v392
    %v394 = vmul.f32 %v391, %v393
    %v395 = vadd.f32 %v391, %v394
    %vm396 = vweird.f32 %v390
    %vm397 = vweird.f32 %v391
    %vm398 = vmor %vm396, %vm397
    %v399 = vsel %vm398, %v391, %v395
    %v400 = vand.u32 2147483647, %v390
    %vm401 = vcmp.eq.f32.partialorder %v400, 8.507059e+37
    %v402 = vand.u32 %v390, 2147483648
    %v403 = vor.u32 1.1754944e-38, %v402
    %v404 = vsel %vm401, %v403, %v399
    %v405 = vmul.f32 1.0, %v404
    %v406 = vadd.f32 %v384, %v267
    %408 = vrot.lane.b32.xlu0 %v406, 64
    %v409 = vpop.permute.xlu0 %408
    %v411 = vmul.f32 %v405, %v409
    %413 = vrot.lane.b32.xlu0 %v411, 64
    %v414 = vpop.permute.xlu0 %413
    %v416 = vadd.f32 %v202, %v414
    %v417 = vtanh.pop %v416
    %v418 = vsub.f32 1.0, %v405
    %420 = vrot.lane.b32.xlu0 %v417, 96
    %v421 = vpop.permute.xlu0 %420
    %v423 = vmul.f32 %v418, %v421
    %v424 = vmul.f32 %v405, %v358
    %v425 = vadd.f32 %v423, %v424
    %427 = vrot.lane.b32.xlu0 %v425, 96
    %v428 = vpop.permute.xlu0 %427
    %430 = vst.msk [vmem:[#allocation2 + $0x10] sm:$0xff] %vm222, %v428
    %v431 = vsel %vm222, %v428, 0
    %433 = vmatpush.msra.mxu0 0.0
    %434 = vmatpush.msra.mxu0 0.0
    %435 = vmatpush.msra.mxu0 0.0
    %436 = vmatpush.msra.mxu0 0.0
    %437 = vmatpush.msra.mxu0 0.0
    %438 = vmatpush.msra.mxu0 0.0
    %439 = vmatpush.msra.mxu0 0.0
    %440 = vmatpush.msra.mxu0 0.0
    %441 = vmatpush.msra.mxu0 0.0
    %442 = vmatpush.msra.mxu0 0.0
    %443 = vmatpush.msra.mxu0 0.0
    %444 = vmatpush.msra.mxu0 0.0
    %445 = vmatpush.msra.mxu0 %v143
    %446 = vmatpush.msra.mxu0 %v142
    %447 = vmatpush.msra.mxu0 %v141
    %448 = vmatpush.msra.mxu0 %v140
    %449 = vmatmul.f32.gmra.mxu0 %v431
    %v450 = vpop.f32.mrf.mxu0
    %v451 = vadd.f32 0.0, %v450
    %452 = vdwg.mxu0
    %v453 = vadd.f32 %v205, %v451
    %v454 = vxor.u32 %v453, 2147483648
    %v455 = vmul.f32 %v454, 1.442695
    %v456 = vpow.pop %v455
    %v457 = vadd.f32 %v456, 1.0
    %v458 = vrcp.pop %v457
    %v459 = vmul.f32 %v457, %v458
    %v460 = vsub.f32 1.0, %v459
    %v461 = vmul.f32 %v458, %v460
    %v462 = vadd.f32 %v458, %v461
    %vm463 = vweird.f32 %v457
    %vm464 = vweird.f32 %v458
    %vm465 = vmor %vm463, %vm464
    %v466 = vsel %vm465, %v458, %v462
    %v467 = vand.u32 2147483647, %v457
    %vm468 = vcmp.eq.f32.partialorder %v467, 8.507059e+37
    %v469 = vand.u32 %v457, 2147483648
    %v470 = vor.u32 1.1754944e-38, %v469
    %v471 = vsel %vm468, %v470, %v466
    %v472 = vmul.f32 1.0, %v471
    %v473 = vadd.f32 %v451, %v267
    %475 = vrot.lane.b32.xlu0 %v473, 64
    %v476 = vpop.permute.xlu0 %475
    %v478 = vmul.f32 %v472, %v476
    %480 = vrot.lane.b32.xlu0 %v478, 64
    %v481 = vpop.permute.xlu0 %480
    %v483 = vadd.f32 %v205, %v481
    %v484 = vtanh.pop %v483
    %v485 = vsub.f32 1.0, %v472
    %487 = vrot.lane.b32.xlu0 %v484, 96
    %v488 = vpop.permute.xlu0 %487
    %v490 = vmul.f32 %v485, %v488
    %v491 = vmul.f32 %v472, %v425
    %v492 = vadd.f32 %v490, %v491
    %494 = vrot.lane.b32.xlu0 %v492, 96
    %v495 = vpop.permute.xlu0 %494
    %497 = vst.msk [vmem:[#allocation2 + $0x18] sm:$0xff] %vm222, %v495
    %v498 = vsel %vm222, %v495, 0
    %500 = vmatpush.msra.mxu0 0.0
    %501 = vmatpush.msra.mxu0 0.0
    %502 = vmatpush.msra.mxu0 0.0
    %503 = vmatpush.msra.mxu0 0.0
    %504 = vmatpush.msra.mxu0 0.0
    %505 = vmatpush.msra.mxu0 0.0
    %506 = vmatpush.msra.mxu0 0.0
    %507 = vmatpush.msra.mxu0 0.0
    %508 = vmatpush.msra.mxu0 0.0
    %509 = vmatpush.msra.mxu0 0.0
    %510 = vmatpush.msra.mxu0 0.0
    %511 = vmatpush.msra.mxu0 0.0
    %512 = vmatpush.msra.mxu0 %v143
    %513 = vmatpush.msra.mxu0 %v142
    %514 = vmatpush.msra.mxu0 %v141
    %515 = vmatpush.msra.mxu0 %v140
    %516 = vmatmul.f32.gmra.mxu0 %v498
    %v517 = vpop.f32.mrf.mxu0
    %v518 = vadd.f32 0.0, %v517
    %519 = vdwg.mxu0
    %v520 = vadd.f32 %v208, %v518
    %v521 = vxor.u32 %v520, 2147483648
    %v522 = vmul.f32 %v521, 1.442695
    %v523 = vpow.pop %v522
    %v524 = vadd.f32 %v523, 1.0
    %v525 = vrcp.pop %v524
    %v526 = vmul.f32 %v524, %v525
    %v527 = vsub.f32 1.0, %v526
    %v528 = vmul.f32 %v525, %v527
    %v529 = vadd.f32 %v525, %v528
    %vm530 = vweird.f32 %v524
    %vm531 = vweird.f32 %v525
    %vm532 = vmor %vm530, %vm531
    %v533 = vsel %vm532, %v525, %v529
    %v534 = vand.u32 2147483647, %v524
    %vm535 = vcmp.eq.f32.partialorder %v534, 8.507059e+37
    %v536 = vand.u32 %v524, 2147483648
    %v537 = vor.u32 1.1754944e-38, %v536
    %v538 = vsel %vm535, %v537, %v533
    %v539 = vmul.f32 1.0, %v538
    %v540 = vadd.f32 %v518, %v267
    %542 = vrot.lane.b32.xlu0 %v540, 64
    %v543 = vpop.permute.xlu0 %542
    %v545 = vmul.f32 %v539, %v543
    %547 = vrot.lane.b32.xlu0 %v545, 64
    %v548 = vpop.permute.xlu0 %547
    %v550 = vadd.f32 %v208, %v548
    %v551 = vtanh.pop %v550
    %v552 = vsub.f32 1.0, %v539
    %554 = vrot.lane.b32.xlu0 %v551, 96
    %v555 = vpop.permute.xlu0 %554
    %v557 = vmul.f32 %v552, %v555
    %v558 = vmul.f32 %v539, %v492
    %v559 = vadd.f32 %v557, %v558
    %561 = vrot.lane.b32.xlu0 %v559, 96
    %v562 = vpop.permute.xlu0 %561
    %564 = vst.msk [vmem:[#allocation2 + $0x20] sm:$0xff] %vm222, %v562
    %v565 = vsel %vm222, %v562, 0
    %567 = vmatpush.msra.mxu0 0.0
    %568 = vmatpush.msra.mxu0 0.0
    %569 = vmatpush.msra.mxu0 0.0
    %570 = vmatpush.msra.mxu0 0.0
    %571 = vmatpush.msra.mxu0 0.0
    %572 = vmatpush.msra.mxu0 0.0
    %573 = vmatpush.msra.mxu0 0.0
    %574 = vmatpush.msra.mxu0 0.0
    %575 = vmatpush.msra.mxu0 0.0
    %576 = vmatpush.msra.mxu0 0.0
    %577 = vmatpush.msra.mxu0 0.0
    %578 = vmatpush.msra.mxu0 0.0
    %579 = vmatpush.msra.mxu0 %v143
    %580 = vmatpush.msra.mxu0 %v142
    %581 = vmatpush.msra.mxu0 %v141
    %582 = vmatpush.msra.mxu0 %v140
    %583 = vmatmul.f32.gmra.mxu0 %v565
    %v584 = vpop.f32.mrf.mxu0
    %v585 = vadd.f32 0.0, %v584
    %586 = vdwg.mxu0
    %v587 = vadd.f32 %v211, %v585
    %v588 = vxor.u32 %v587, 2147483648
    %v589 = vmul.f32 %v588, 1.442695
    %v590 = vpow.pop %v589
    %v591 = vadd.f32 %v590, 1.0
    %v592 = vrcp.pop %v591
    %v593 = vmul.f32 %v591, %v592
    %v594 = vsub.f32 1.0, %v593
    %v595 = vmul.f32 %v592, %v594
    %v596 = vadd.f32 %v592, %v595
    %vm597 = vweird.f32 %v591
    %vm598 = vweird.f32 %v592
    %vm599 = vmor %vm597, %vm598
    %v600 = vsel %vm599, %v592, %v596
    %v601 = vand.u32 2147483647, %v591
    %vm602 = vcmp.eq.f32.partialorder %v601, 8.507059e+37
    %v603 = vand.u32 %v591, 2147483648
    %v604 = vor.u32 1.1754944e-38, %v603
    %v605 = vsel %vm602, %v604, %v600
    %v606 = vmul.f32 1.0, %v605
    %v607 = vadd.f32 %v585, %v267
    %609 = vrot.lane.b32.xlu0 %v607, 64
    %v610 = vpop.permute.xlu0 %609
    %v612 = vmul.f32 %v606, %v610
    %614 = vrot.lane.b32.xlu0 %v612, 64
    %v615 = vpop.permute.xlu0 %614
    %v617 = vadd.f32 %v211, %v615
    %v618 = vtanh.pop %v617
    %v619 = vsub.f32 1.0, %v606
    %621 = vrot.lane.b32.xlu0 %v618, 96
    %v622 = vpop.permute.xlu0 %621
    %v624 = vmul.f32 %v619, %v622
    %v625 = vmul.f32 %v606, %v559
    %v626 = vadd.f32 %v624, %v625
    %628 = vrot.lane.b32.xlu0 %v626, 96
    %v629 = vpop.permute.xlu0 %628
    %631 = vst.msk [vmem:[#allocation2 + $0x28] sm:$0xff] %vm222, %v629
    %v632 = vsel %vm222, %v629, 0
    %634 = vmatpush.msra.mxu0 0.0
    %635 = vmatpush.msra.mxu0 0.0
    %636 = vmatpush.msra.mxu0 0.0
    %637 = vmatpush.msra.mxu0 0.0
    %638 = vmatpush.msra.mxu0 0.0
    %639 = vmatpush.msra.mxu0 0.0
    %640 = vmatpush.msra.mxu0 0.0
    %641 = vmatpush.msra.mxu0 0.0
    %642 = vmatpush.msra.mxu0 0.0
    %643 = vmatpush.msra.mxu0 0.0
    %644 = vmatpush.msra.mxu0 0.0
    %645 = vmatpush.msra.mxu0 0.0
    %646 = vmatpush.msra.mxu0 %v143
    %647 = vmatpush.msra.mxu0 %v142
    %648 = vmatpush.msra.mxu0 %v141
    %649 = vmatpush.msra.mxu0 %v140
    %650 = vmatmul.f32.gmra.mxu0 %v632
    %v651 = vpop.f32.mrf.mxu0
    %v652 = vadd.f32 0.0, %v651
    %653 = vdwg.mxu0
    %v654 = vadd.f32 %v214, %v652
    %v655 = vxor.u32 %v654, 2147483648
    %v656 = vmul.f32 %v655, 1.442695
    %v657 = vpow.pop %v656
    %v658 = vadd.f32 %v657, 1.0
    %v659 = vrcp.pop %v658
    %v660 = vmul.f32 %v658, %v659
    %v661 = vsub.f32 1.0, %v660
    %v662 = vmul.f32 %v659, %v661
    %v663 = vadd.f32 %v659, %v662
    %vm664 = vweird.f32 %v658
    %vm665 = vweird.f32 %v659
    %vm666 = vmor %vm664, %vm665
    %v667 = vsel %vm666, %v659, %v663
    %v668 = vand.u32 2147483647, %v658
    %vm669 = vcmp.eq.f32.partialorder %v668, 8.507059e+37
    %v670 = vand.u32 %v658, 2147483648
    %v671 = vor.u32 1.1754944e-38, %v670
    %v672 = vsel %vm669, %v671, %v667
    %v673 = vmul.f32 1.0, %v672
    %v674 = vadd.f32 %v652, %v267
    %676 = vrot.lane.b32.xlu0 %v674, 64
    %v677 = vpop.permute.xlu0 %676
    %v679 = vmul.f32 %v673, %v677
    %681 = vrot.lane.b32.xlu0 %v679, 64
    %v682 = vpop.permute.xlu0 %681
    %v684 = vadd.f32 %v214, %v682
    %v685 = vtanh.pop %v684
    %v686 = vsub.f32 1.0, %v673
    %688 = vrot.lane.b32.xlu0 %v685, 96
    %v689 = vpop.permute.xlu0 %688
    %v691 = vmul.f32 %v686, %v689
    %v692 = vmul.f32 %v673, %v626
    %v693 = vadd.f32 %v691, %v692
    %695 = vrot.lane.b32.xlu0 %v693, 96
    %v696 = vpop.permute.xlu0 %695
    %698 = vst.msk [vmem:[#allocation2 + $0x30] sm:$0xff] %vm222, %v696
    %v699 = vsel %vm222, %v696, 0
    %701 = vmatpush.msra.mxu0 0.0
    %702 = vmatpush.msra.mxu0 0.0
    %703 = vmatpush.msra.mxu0 0.0
    %704 = vmatpush.msra.mxu0 0.0
    %705 = vmatpush.msra.mxu0 0.0
    %706 = vmatpush.msra.mxu0 0.0
    %707 = vmatpush.msra.mxu0 0.0
    %708 = vmatpush.msra.mxu0 0.0
    %709 = vmatpush.msra.mxu0 0.0
    %710 = vmatpush.msra.mxu0 0.0
    %711 = vmatpush.msra.mxu0 0.0
    %712 = vmatpush.msra.mxu0 0.0
    %713 = vmatpush.msra.mxu0 %v143
    %714 = vmatpush.msra.mxu0 %v142
    %715 = vmatpush.msra.mxu0 %v141
    %716 = vmatpush.msra.mxu0 %v140
    %717 = vmatmul.f32.gmra.mxu0 %v699
    %v718 = vpop.f32.mrf.mxu0
    %v719 = vadd.f32 0.0, %v718
    %720 = vdwg.mxu0
    %v721 = vadd.f32 %v217, %v719
    %v722 = vxor.u32 %v721, 2147483648
    %v723 = vmul.f32 %v722, 1.442695
    %v724 = vpow.pop %v723
    %v725 = vadd.f32 %v724, 1.0
    %v726 = vrcp.pop %v725
    %v727 = vmul.f32 %v725, %v726
    %v728 = vsub.f32 1.0, %v727
    %v729 = vmul.f32 %v726, %v728
    %v730 = vadd.f32 %v726, %v729
    %vm731 = vweird.f32 %v725
    %vm732 = vweird.f32 %v726
    %vm733 = vmor %vm731, %vm732
    %v734 = vsel %vm733, %v726, %v730
    %v735 = vand.u32 2147483647, %v725
    %vm736 = vcmp.eq.f32.partialorder %v735, 8.507059e+37
    %v737 = vand.u32 %v725, 2147483648
    %v738 = vor.u32 1.1754944e-38, %v737
    %v739 = vsel %vm736, %v738, %v734
    %v740 = vmul.f32 1.0, %v739
    %v741 = vadd.f32 %v719, %v267
    %743 = vrot.lane.b32.xlu0 %v741, 64
    %v744 = vpop.permute.xlu0 %743
    %v746 = vmul.f32 %v740, %v744
    %748 = vrot.lane.b32.xlu0 %v746, 64
    %v749 = vpop.permute.xlu0 %748
    %v751 = vadd.f32 %v217, %v749
    %v752 = vtanh.pop %v751
    %v753 = vsub.f32 1.0, %v740
    %755 = vrot.lane.b32.xlu0 %v752, 96
    %v756 = vpop.permute.xlu0 %755
    %v758 = vmul.f32 %v753, %v756
    %v759 = vmul.f32 %v740, %v693
    %v760 = vadd.f32 %v758, %v759
    %762 = vrot.lane.b32.xlu0 %v760, 96
    %v763 = vpop.permute.xlu0 %762
    %765 = vst.msk [vmem:[#allocation2 + $0x38] sm:$0xff] %vm222, %v763
    %766 = vst.msk [vmem:[#allocation15] sm:$0xff] %vm222, %v763
    %v767 = vld [vmem:[#allocation2] sm:$0xff]
    %v768 = vld [vmem:[#allocation2 + $0x8] sm:$0xff]
    %v769 = vld [vmem:[#allocation2 + $0x10] sm:$0xff]
    %v770 = vld [vmem:[#allocation2 + $0x18] sm:$0xff]
    %v771 = vld [vmem:[#allocation2 + $0x20] sm:$0xff]
    %v772 = vld [vmem:[#allocation2 + $0x28] sm:$0xff]
    %v773 = vld [vmem:[#allocation2 + $0x30] sm:$0xff]
    %v774 = vld [vmem:[#allocation2 + $0x38] sm:$0xff]
    %v775 = vld [vmem:[%s6] sm:$0xff]
    %v776 = vld [vmem:[%s6 + $0x8] sm:$0xff]
    %v777 = vld [vmem:[%s6 + $0x10] sm:$0xff]
    %v778 = vld [vmem:[%s6 + $0x18] sm:$0xff]
    %v779 = vld [vmem:[%s7] sm:$0xff]
    %v780 = vld [vmem:[%s7 + $0x8] sm:$0xff]
    %v781 = vld [vmem:[%s7 + $0x10] sm:$0xff]
    %v782 = vld [vmem:[%s7 + $0x18] sm:$0xff]
    %v783 = vld [vmem:[#allocation8] sm:$0x1]
    %v784 = vld [vmem:[#allocation9] sm:$0x1]
    %v786 = vperm.slane %v783, 0
    %v789 = vsel %vm222, %v767, 0
    %v792 = vsel %vm222, %v768, 0
    %v795 = vsel %vm222, %v769, 0
    %v798 = vsel %vm222, %v770, 0
    %v801 = vsel %vm222, %v771, 0
    %v804 = vsel %vm222, %v772, 0
    %v807 = vsel %vm222, %v773, 0
    %v810 = vsel %vm222, %v774, 0
    %812 = vmatpush.msra.mxu0 0.0
    %813 = vmatpush.msra.mxu0 0.0
    %814 = vmatpush.msra.mxu0 0.0
    %815 = vmatpush.msra.mxu0 0.0
    %816 = vmatpush.msra.mxu0 0.0
    %817 = vmatpush.msra.mxu0 0.0
    %818 = vmatpush.msra.mxu0 0.0
    %819 = vmatpush.msra.mxu0 0.0
    %820 = vmatpush.msra.mxu0 0.0
    %821 = vmatpush.msra.mxu0 0.0
    %822 = vmatpush.msra.mxu0 0.0
    %823 = vmatpush.msra.mxu0 0.0
    %824 = vmatpush.msra.mxu0 %v778
    %825 = vmatpush.msra.mxu0 %v777
    %826 = vmatpush.msra.mxu0 %v776
    %827 = vmatpush.msra.mxu0 %v775
    %828 = vmatmul.f32.gmra.mxu0 %v789
    %v829 = vpop.f32.mrf.mxu0
    %v830 = vadd.f32 %v786, %v829
    %831 = vmatmul.f32.gmra.mxu0 %v792
    %v832 = vpop.f32.mrf.mxu0
    %v833 = vadd.f32 %v786, %v832
    %834 = vmatmul.f32.gmra.mxu0 %v795
    %v835 = vpop.f32.mrf.mxu0
    %v836 = vadd.f32 %v786, %v835
    %837 = vmatmul.f32.gmra.mxu0 %v798
    %v838 = vpop.f32.mrf.mxu0
    %v839 = vadd.f32 %v786, %v838
    %840 = vmatmul.f32.gmra.mxu0 %v801
    %v841 = vpop.f32.mrf.mxu0
    %v842 = vadd.f32 %v786, %v841
    %843 = vmatmul.f32.gmra.mxu0 %v804
    %v844 = vpop.f32.mrf.mxu0
    %v845 = vadd.f32 %v786, %v844
    %846 = vmatmul.f32.gmra.mxu0 %v807
    %v847 = vpop.f32.mrf.mxu0
    %v848 = vadd.f32 %v786, %v847
    %849 = vmatmul.f32.gmra.mxu0 %v810
    %v850 = vpop.f32.mrf.mxu0
    %v851 = vadd.f32 %v786, %v850
    %852 = vdwg.mxu0
    %v854 = vperm.slane %v784, 0
    %s855 = scalar_lea.vmem [#allocation3], 8
    %v856 = vld [vmem:[%s855] sm:$0xff]
    %v858 = vsel %vm222, %v856, 0
    %860 = vmatpush.msra.mxu0 0.0
    %861 = vmatpush.msra.mxu0 0.0
    %862 = vmatpush.msra.mxu0 0.0
    %863 = vmatpush.msra.mxu0 0.0
    %864 = vmatpush.msra.mxu0 0.0
    %865 = vmatpush.msra.mxu0 0.0
    %866 = vmatpush.msra.mxu0 0.0
    %867 = vmatpush.msra.mxu0 0.0
    %868 = vmatpush.msra.mxu0 0.0
    %869 = vmatpush.msra.mxu0 0.0
    %870 = vmatpush.msra.mxu0 0.0
    %871 = vmatpush.msra.mxu0 0.0
    %872 = vmatpush.msra.mxu0 %v782
    %873 = vmatpush.msra.mxu0 %v781
    %874 = vmatpush.msra.mxu0 %v780
    %875 = vmatpush.msra.mxu0 %v779
    %876 = vmatmul.f32.gmra.mxu0 %v858
    %v877 = vpop.f32.mrf.mxu0
    %v878 = vadd.f32 0.0, %v877
    %879 = vdwg.mxu0
    %v880 = vadd.f32 %v830, %v878
    %v881 = vxor.u32 %v880, 2147483648
    %v882 = vmul.f32 %v881, 1.442695
    %v883 = vpow.pop %v882
    %v884 = vadd.f32 %v883, 1.0
    %v885 = vrcp.pop %v884
    %v886 = vmul.f32 %v884, %v885
    %v887 = vsub.f32 1.0, %v886
    %v888 = vmul.f32 %v885, %v887
    %v889 = vadd.f32 %v885, %v888
    %vm890 = vweird.f32 %v884
    %vm891 = vweird.f32 %v885
    %vm892 = vmor %vm890, %vm891
    %v893 = vsel %vm892, %v885, %v889
    %v894 = vand.u32 2147483647, %v884
    %vm895 = vcmp.eq.f32.partialorder %v894, 8.507059e+37
    %v896 = vand.u32 %v884, 2147483648
    %v897 = vor.u32 1.1754944e-38, %v896
    %v898 = vsel %vm895, %v897, %v893
    %v899 = vmul.f32 1.0, %v898
    %900 = vrot.lane.b32.xlu0 %v854, 64
    %v901 = vpop.permute.xlu0 %900
    %v903 = vadd.f32 %v878, %v901
    %905 = vrot.lane.b32.xlu0 %v903, 64
    %v906 = vpop.permute.xlu0 %905
    %v908 = vmul.f32 %v899, %v906
    %910 = vrot.lane.b32.xlu0 %v908, 64
    %v911 = vpop.permute.xlu0 %910
    %v913 = vadd.f32 %v830, %v911
    %v914 = vtanh.pop %v913
    %v915 = vsub.f32 1.0, %v899
    %917 = vrot.lane.b32.xlu0 %v914, 96
    %v918 = vpop.permute.xlu0 %917
    %v920 = vmul.f32 %v915, %v918
    %921 = vrot.lane.b32.xlu0 %v856, 32
    %v922 = vpop.permute.xlu0 %921
    %v924 = vmul.f32 %v899, %v922
    %v925 = vadd.f32 %v920, %v924
    %927 = vrot.lane.b32.xlu0 %v925, 96
    %v928 = vpop.permute.xlu0 %927
    %930 = vst.msk [vmem:[#allocation2] sm:$0xff] %vm222, %v928
    %v931 = vsel %vm222, %v928, 0
    %933 = vmatpush.msra.mxu0 0.0
    %934 = vmatpush.msra.mxu0 0.0
    %935 = vmatpush.msra.mxu0 0.0
    %936 = vmatpush.msra.mxu0 0.0
    %937 = vmatpush.msra.mxu0 0.0
    %938 = vmatpush.msra.mxu0 0.0
    %939 = vmatpush.msra.mxu0 0.0
    %940 = vmatpush.msra.mxu0 0.0
    %941 = vmatpush.msra.mxu0 0.0
    %942 = vmatpush.msra.mxu0 0.0
    %943 = vmatpush.msra.mxu0 0.0
    %944 = vmatpush.msra.mxu0 0.0
    %945 = vmatpush.msra.mxu0 %v782
    %946 = vmatpush.msra.mxu0 %v781
    %947 = vmatpush.msra.mxu0 %v780
    %948 = vmatpush.msra.mxu0 %v779
    %949 = vmatmul.f32.gmra.mxu0 %v931
    %v950 = vpop.f32.mrf.mxu0
    %v951 = vadd.f32 0.0, %v950
    %952 = vdwg.mxu0
    %v953 = vadd.f32 %v833, %v951
    %v954 = vxor.u32 %v953, 2147483648
    %v955 = vmul.f32 %v954, 1.442695
    %v956 = vpow.pop %v955
    %v957 = vadd.f32 %v956, 1.0
    %v958 = vrcp.pop %v957
    %v959 = vmul.f32 %v957, %v958
    %v960 = vsub.f32 1.0, %v959
    %v961 = vmul.f32 %v958, %v960
    %v962 = vadd.f32 %v958, %v961
    %vm963 = vweird.f32 %v957
    %vm964 = vweird.f32 %v958
    %vm965 = vmor %vm963, %vm964
    %v966 = vsel %vm965, %v958, %v962
    %v967 = vand.u32 2147483647, %v957
    %vm968 = vcmp.eq.f32.partialorder %v967, 8.507059e+37
    %v969 = vand.u32 %v957, 2147483648
    %v970 = vor.u32 1.1754944e-38, %v969
    %v971 = vsel %vm968, %v970, %v966
    %v972 = vmul.f32 1.0, %v971
    %v973 = vadd.f32 %v951, %v901
    %975 = vrot.lane.b32.xlu0 %v973, 64
    %v976 = vpop.permute.xlu0 %975
    %v978 = vmul.f32 %v972, %v976
    %980 = vrot.lane.b32.xlu0 %v978, 64
    %v981 = vpop.permute.xlu0 %980
    %v983 = vadd.f32 %v833, %v981
    %v984 = vtanh.pop %v983
    %v985 = vsub.f32 1.0, %v972
    %987 = vrot.lane.b32.xlu0 %v984, 96
    %v988 = vpop.permute.xlu0 %987
    %v990 = vmul.f32 %v985, %v988
    %v991 = vmul.f32 %v972, %v925
    %v992 = vadd.f32 %v990, %v991
    %994 = vrot.lane.b32.xlu0 %v992, 96
    %v995 = vpop.permute.xlu0 %994
    %997 = vst.msk [vmem:[#allocation2 + $0x8] sm:$0xff] %vm222, %v995
    %v998 = vsel %vm222, %v995, 0
    %1000 = vmatpush.msra.mxu0 0.0
    %1001 = vmatpush.msra.mxu0 0.0
    %1002 = vmatpush.msra.mxu0 0.0
    %1003 = vmatpush.msra.mxu0 0.0
    %1004 = vmatpush.msra.mxu0 0.0
    %1005 = vmatpush.msra.mxu0 0.0
    %1006 = vmatpush.msra.mxu0 0.0
    %1007 = vmatpush.msra.mxu0 0.0
    %1008 = vmatpush.msra.mxu0 0.0
    %1009 = vmatpush.msra.mxu0 0.0
    %1010 = vmatpush.msra.mxu0 0.0
    %1011 = vmatpush.msra.mxu0 0.0
    %1012 = vmatpush.msra.mxu0 %v782
    %1013 = vmatpush.msra.mxu0 %v781
    %1014 = vmatpush.msra.mxu0 %v780
    %1015 = vmatpush.msra.mxu0 %v779
    %1016 = vmatmul.f32.gmra.mxu0 %v998
    %v1017 = vpop.f32.mrf.mxu0
    %v1018 = vadd.f32 0.0, %v1017
    %1019 = vdwg.mxu0
    %v1020 = vadd.f32 %v836, %v1018
    %v1021 = vxor.u32 %v1020, 2147483648
    %v1022 = vmul.f32 %v1021, 1.442695
    %v1023 = vpow.pop %v1022
    %v1024 = vadd.f32 %v1023, 1.0
    %v1025 = vrcp.pop %v1024
    %v1026 = vmul.f32 %v1024, %v1025
    %v1027 = vsub.f32 1.0, %v1026
    %v1028 = vmul.f32 %v1025, %v1027
    %v1029 = vadd.f32 %v1025, %v1028
    %vm1030 = vweird.f32 %v1024
    %vm1031 = vweird.f32 %v1025
    %vm1032 = vmor %vm1030, %vm1031
    %v1033 = vsel %vm1032, %v1025, %v1029
    %v1034 = vand.u32 2147483647, %v1024
    %vm1035 = vcmp.eq.f32.partialorder %v1034, 8.507059e+37
    %v1036 = vand.u32 %v1024, 2147483648
    %v1037 = vor.u32 1.1754944e-38, %v1036
    %v1038 = vsel %vm1035, %v1037, %v1033
    %v1039 = vmul.f32 1.0, %v1038
    %v1040 = vadd.f32 %v1018, %v901
    %1042 = vrot.lane.b32.xlu0 %v1040, 64
    %v1043 = vpop.permute.xlu0 %1042
    %v1045 = vmul.f32 %v1039, %v1043
    %1047 = vrot.lane.b32.xlu0 %v1045, 64
    %v1048 = vpop.permute.xlu0 %1047
    %v1050 = vadd.f32 %v836, %v1048
    %v1051 = vtanh.pop %v1050
    %v1052 = vsub.f32 1.0, %v1039
    %1054 = vrot.lane.b32.xlu0 %v1051, 96
    %v1055 = vpop.permute.xlu0 %1054
    %v1057 = vmul.f32 %v1052, %v1055
    %v1058 = vmul.f32 %v1039, %v992
    %v1059 = vadd.f32 %v1057, %v1058
    %1061 = vrot.lane.b32.xlu0 %v1059, 96
    %v1062 = vpop.permute.xlu0 %1061
    %1064 = vst.msk [vmem:[#allocation2 + $0x10] sm:$0xff] %vm222, %v1062
    %v1065 = vsel %vm222, %v1062, 0
    %1067 = vmatpush.msra.mxu0 0.0
    %1068 = vmatpush.msra.mxu0 0.0
    %1069 = vmatpush.msra.mxu0 0.0
    %1070 = vmatpush.msra.mxu0 0.0
    %1071 = vmatpush.msra.mxu0 0.0
    %1072 = vmatpush.msra.mxu0 0.0
    %1073 = vmatpush.msra.mxu0 0.0
    %1074 = vmatpush.msra.mxu0 0.0
    %1075 = vmatpush.msra.mxu0 0.0
    %1076 = vmatpush.msra.mxu0 0.0
    %1077 = vmatpush.msra.mxu0 0.0
    %1078 = vmatpush.msra.mxu0 0.0
    %1079 = vmatpush.msra.mxu0 %v782
    %1080 = vmatpush.msra.mxu0 %v781
    %1081 = vmatpush.msra.mxu0 %v780
    %1082 = vmatpush.msra.mxu0 %v779
    %1083 = vmatmul.f32.gmra.mxu0 %v1065
    %v1084 = vpop.f32.mrf.mxu0
    %v1085 = vadd.f32 0.0, %v1084
    %1086 = vdwg.mxu0
    %v1087 = vadd.f32 %v839, %v1085
    %v1088 = vxor.u32 %v1087, 2147483648
    %v1089 = vmul.f32 %v1088, 1.442695
    %v1090 = vpow.pop %v1089
    %v1091 = vadd.f32 %v1090, 1.0
    %v1092 = vrcp.pop %v1091
    %v1093 = vmul.f32 %v1091, %v1092
    %v1094 = vsub.f32 1.0, %v1093
    %v1095 = vmul.f32 %v1092, %v1094
    %v1096 = vadd.f32 %v1092, %v1095
    %vm1097 = vweird.f32 %v1091
    %vm1098 = vweird.f32 %v1092
    %vm1099 = vmor %vm1097, %vm1098
    %v1100 = vsel %vm1099, %v1092, %v1096
    %v1101 = vand.u32 2147483647, %v1091
    %vm1102 = vcmp.eq.f32.partialorder %v1101, 8.507059e+37
    %v1103 = vand.u32 %v1091, 2147483648
    %v1104 = vor.u32 1.1754944e-38, %v1103
    %v1105 = vsel %vm1102, %v1104, %v1100
    %v1106 = vmul.f32 1.0, %v1105
    %v1107 = vadd.f32 %v1085, %v901
    %1109 = vrot.lane.b32.xlu0 %v1107, 64
    %v1110 = vpop.permute.xlu0 %1109
    %v1112 = vmul.f32 %v1106, %v1110
    %1114 = vrot.lane.b32.xlu0 %v1112, 64
    %v1115 = vpop.permute.xlu0 %1114
    %v1117 = vadd.f32 %v839, %v1115
    %v1118 = vtanh.pop %v1117
    %v1119 = vsub.f32 1.0, %v1106
    %1121 = vrot.lane.b32.xlu0 %v1118, 96
    %v1122 = vpop.permute.xlu0 %1121
    %v1124 = vmul.f32 %v1119, %v1122
    %v1125 = vmul.f32 %v1106, %v1059
    %v1126 = vadd.f32 %v1124, %v1125
    %1128 = vrot.lane.b32.xlu0 %v1126, 96
    %v1129 = vpop.permute.xlu0 %1128
    %1131 = vst.msk [vmem:[#allocation2 + $0x18] sm:$0xff] %vm222, %v1129
    %v1132 = vsel %vm222, %v1129, 0
    %1134 = vmatpush.msra.mxu0 0.0
    %1135 = vmatpush.msra.mxu0 0.0
    %1136 = vmatpush.msra.mxu0 0.0
    %1137 = vmatpush.msra.mxu0 0.0
    %1138 = vmatpush.msra.mxu0 0.0
    %1139 = vmatpush.msra.mxu0 0.0
    %1140 = vmatpush.msra.mxu0 0.0
    %1141 = vmatpush.msra.mxu0 0.0
    %1142 = vmatpush.msra.mxu0 0.0
    %1143 = vmatpush.msra.mxu0 0.0
    %1144 = vmatpush.msra.mxu0 0.0
    %1145 = vmatpush.msra.mxu0 0.0
    %1146 = vmatpush.msra.mxu0 %v782
    %1147 = vmatpush.msra.mxu0 %v781
    %1148 = vmatpush.msra.mxu0 %v780
    %1149 = vmatpush.msra.mxu0 %v779
    %1150 = vmatmul.f32.gmra.mxu0 %v1132
    %v1151 = vpop.f32.mrf.mxu0
    %v1152 = vadd.f32 0.0, %v1151
    %1153 = vdwg.mxu0
    %v1154 = vadd.f32 %v842, %v1152
    %v1155 = vxor.u32 %v1154, 2147483648
    %v1156 = vmul.f32 %v1155, 1.442695
    %v1157 = vpow.pop %v1156
    %v1158 = vadd.f32 %v1157, 1.0
    %v1159 = vrcp.pop %v1158
    %v1160 = vmul.f32 %v1158, %v1159
    %v1161 = vsub.f32 1.0, %v1160
    %v1162 = vmul.f32 %v1159, %v1161
    %v1163 = vadd.f32 %v1159, %v1162
    %vm1164 = vweird.f32 %v1158
    %vm1165 = vweird.f32 %v1159
    %vm1166 = vmor %vm1164, %vm1165
    %v1167 = vsel %vm1166, %v1159, %v1163
    %v1168 = vand.u32 2147483647, %v1158
    %vm1169 = vcmp.eq.f32.partialorder %v1168, 8.507059e+37
    %v1170 = vand.u32 %v1158, 2147483648
    %v1171 = vor.u32 1.1754944e-38, %v1170
    %v1172 = vsel %vm1169, %v1171, %v1167
    %v1173 = vmul.f32 1.0, %v1172
    %v1174 = vadd.f32 %v1152, %v901
    %1176 = vrot.lane.b32.xlu0 %v1174, 64
    %v1177 = vpop.permute.xlu0 %1176
    %v1179 = vmul.f32 %v1173, %v1177
    %1181 = vrot.lane.b32.xlu0 %v1179, 64
    %v1182 = vpop.permute.xlu0 %1181
    %v1184 = vadd.f32 %v842, %v1182
    %v1185 = vtanh.pop %v1184
    %v1186 = vsub.f32 1.0, %v1173
    %1188 = vrot.lane.b32.xlu0 %v1185, 96
    %v1189 = vpop.permute.xlu0 %1188
    %v1191 = vmul.f32 %v1186, %v1189
    %v1192 = vmul.f32 %v1173, %v1126
    %v1193 = vadd.f32 %v1191, %v1192
    %1195 = vrot.lane.b32.xlu0 %v1193, 96
    %v1196 = vpop.permute.xlu0 %1195
    %1198 = vst.msk [vmem:[#allocation2 + $0x20] sm:$0xff] %vm222, %v1196
    %v1199 = vsel %vm222, %v1196, 0
    %1201 = vmatpush.msra.mxu0 0.0
    %1202 = vmatpush.msra.mxu0 0.0
    %1203 = vmatpush.msra.mxu0 0.0
    %1204 = vmatpush.msra.mxu0 0.0
    %1205 = vmatpush.msra.mxu0 0.0
    %1206 = vmatpush.msra.mxu0 0.0
    %1207 = vmatpush.msra.mxu0 0.0
    %1208 = vmatpush.msra.mxu0 0.0
    %1209 = vmatpush.msra.mxu0 0.0
    %1210 = vmatpush.msra.mxu0 0.0
    %1211 = vmatpush.msra.mxu0 0.0
    %1212 = vmatpush.msra.mxu0 0.0
    %1213 = vmatpush.msra.mxu0 %v782
    %1214 = vmatpush.msra.mxu0 %v781
    %1215 = vmatpush.msra.mxu0 %v780
    %1216 = vmatpush.msra.mxu0 %v779
    %1217 = vmatmul.f32.gmra.mxu0 %v1199
    %v1218 = vpop.f32.mrf.mxu0
    %v1219 = vadd.f32 0.0, %v1218
    %1220 = vdwg.mxu0
    %v1221 = vadd.f32 %v845, %v1219
    %v1222 = vxor.u32 %v1221, 2147483648
    %v1223 = vmul.f32 %v1222, 1.442695
    %v1224 = vpow.pop %v1223
    %v1225 = vadd.f32 %v1224, 1.0
    %v1226 = vrcp.pop %v1225
    %v1227 = vmul.f32 %v1225, %v1226
    %v1228 = vsub.f32 1.0, %v1227
    %v1229 = vmul.f32 %v1226, %v1228
    %v1230 = vadd.f32 %v1226, %v1229
    %vm1231 = vweird.f32 %v1225
    %vm1232 = vweird.f32 %v1226
    %vm1233 = vmor %vm1231, %vm1232
    %v1234 = vsel %vm1233, %v1226, %v1230
    %v1235 = vand.u32 2147483647, %v1225
    %vm1236 = vcmp.eq.f32.partialorder %v1235, 8.507059e+37
    %v1237 = vand.u32 %v1225, 2147483648
    %v1238 = vor.u32 1.1754944e-38, %v1237
    %v1239 = vsel %vm1236, %v1238, %v1234
    %v1240 = vmul.f32 1.0, %v1239
    %v1241 = vadd.f32 %v1219, %v901
    %1243 = vrot.lane.b32.xlu0 %v1241, 64
    %v1244 = vpop.permute.xlu0 %1243
    %v1246 = vmul.f32 %v1240, %v1244
    %1248 = vrot.lane.b32.xlu0 %v1246, 64
    %v1249 = vpop.permute.xlu0 %1248
    %v1251 = vadd.f32 %v845, %v1249
    %v1252 = vtanh.pop %v1251
    %v1253 = vsub.f32 1.0, %v1240
    %1255 = vrot.lane.b32.xlu0 %v1252, 96
    %v1256 = vpop.permute.xlu0 %1255
    %v1258 = vmul.f32 %v1253, %v1256
    %v1259 = vmul.f32 %v1240, %v1193
    %v1260 = vadd.f32 %v1258, %v1259
    %1262 = vrot.lane.b32.xlu0 %v1260, 96
    %v1263 = vpop.permute.xlu0 %1262
    %1265 = vst.msk [vmem:[#allocation2 + $0x28] sm:$0xff] %vm222, %v1263
    %v1266 = vsel %vm222, %v1263, 0
    %1268 = vmatpush.msra.mxu0 0.0
    %1269 = vmatpush.msra.mxu0 0.0
    %1270 = vmatpush.msra.mxu0 0.0
    %1271 = vmatpush.msra.mxu0 0.0
    %1272 = vmatpush.msra.mxu0 0.0
    %1273 = vmatpush.msra.mxu0 0.0
    %1274 = vmatpush.msra.mxu0 0.0
    %1275 = vmatpush.msra.mxu0 0.0
    %1276 = vmatpush.msra.mxu0 0.0
    %1277 = vmatpush.msra.mxu0 0.0
    %1278 = vmatpush.msra.mxu0 0.0
    %1279 = vmatpush.msra.mxu0 0.0
    %1280 = vmatpush.msra.mxu0 %v782
    %1281 = vmatpush.msra.mxu0 %v781
    %1282 = vmatpush.msra.mxu0 %v780
    %1283 = vmatpush.msra.mxu0 %v779
    %1284 = vmatmul.f32.gmra.mxu0 %v1266
    %v1285 = vpop.f32.mrf.mxu0
    %v1286 = vadd.f32 0.0, %v1285
    %1287 = vdwg.mxu0
    %v1288 = vadd.f32 %v848, %v1286
    %v1289 = vxor.u32 %v1288, 2147483648
    %v1290 = vmul.f32 %v1289, 1.442695
    %v1291 = vpow.pop %v1290
    %v1292 = vadd.f32 %v1291, 1.0
    %v1293 = vrcp.pop %v1292
    %v1294 = vmul.f32 %v1292, %v1293
    %v1295 = vsub.f32 1.0, %v1294
    %v1296 = vmul.f32 %v1293, %v1295
    %v1297 = vadd.f32 %v1293, %v1296
    %vm1298 = vweird.f32 %v1292
    %vm1299 = vweird.f32 %v1293
    %vm1300 = vmor %vm1298, %vm1299
    %v1301 = vsel %vm1300, %v1293, %v1297
    %v1302 = vand.u32 2147483647, %v1292
    %vm1303 = vcmp.eq.f32.partialorder %v1302, 8.507059e+37
    %v1304 = vand.u32 %v1292, 2147483648
    %v1305 = vor.u32 1.1754944e-38, %v1304
    %v1306 = vsel %vm1303, %v1305, %v1301
    %v1307 = vmul.f32 1.0, %v1306
    %v1308 = vadd.f32 %v1286, %v901
    %1310 = vrot.lane.b32.xlu0 %v1308, 64
    %v1311 = vpop.permute.xlu0 %1310
    %v1313 = vmul.f32 %v1307, %v1311
    %1315 = vrot.lane.b32.xlu0 %v1313, 64
    %v1316 = vpop.permute.xlu0 %1315
    %v1318 = vadd.f32 %v848, %v1316
    %v1319 = vtanh.pop %v1318
    %v1320 = vsub.f32 1.0, %v1307
    %1322 = vrot.lane.b32.xlu0 %v1319, 96
    %v1323 = vpop.permute.xlu0 %1322
    %v1325 = vmul.f32 %v1320, %v1323
    %v1326 = vmul.f32 %v1307, %v1260
    %v1327 = vadd.f32 %v1325, %v1326
    %1329 = vrot.lane.b32.xlu0 %v1327, 96
    %v1330 = vpop.permute.xlu0 %1329
    %1332 = vst.msk [vmem:[#allocation2 + $0x30] sm:$0xff] %vm222, %v1330
    %v1333 = vsel %vm222, %v1330, 0
    %1335 = vmatpush.msra.mxu0 0.0
    %1336 = vmatpush.msra.mxu0 0.0
    %1337 = vmatpush.msra.mxu0 0.0
    %1338 = vmatpush.msra.mxu0 0.0
    %1339 = vmatpush.msra.mxu0 0.0
    %1340 = vmatpush.msra.mxu0 0.0
    %1341 = vmatpush.msra.mxu0 0.0
    %1342 = vmatpush.msra.mxu0 0.0
    %1343 = vmatpush.msra.mxu0 0.0
    %1344 = vmatpush.msra.mxu0 0.0
    %1345 = vmatpush.msra.mxu0 0.0
    %1346 = vmatpush.msra.mxu0 0.0
    %1347 = vmatpush.msra.mxu0 %v782
    %1348 = vmatpush.msra.mxu0 %v781
    %1349 = vmatpush.msra.mxu0 %v780
    %1350 = vmatpush.msra.mxu0 %v779
    %1351 = vmatmul.f32.gmra.mxu0 %v1333
    %v1352 = vpop.f32.mrf.mxu0
    %v1353 = vadd.f32 0.0, %v1352
    %1354 = vdwg.mxu0
    %v1355 = vadd.f32 %v851, %v1353
    %v1356 = vxor.u32 %v1355, 2147483648
    %v1357 = vmul.f32 %v1356, 1.442695
    %v1358 = vpow.pop %v1357
    %v1359 = vadd.f32 %v1358, 1.0
    %v1360 = vrcp.pop %v1359
    %v1361 = vmul.f32 %v1359, %v1360
    %v1362 = vsub.f32 1.0, %v1361
    %v1363 = vmul.f32 %v1360, %v1362
    %v1364 = vadd.f32 %v1360, %v1363
    %vm1365 = vweird.f32 %v1359
    %vm1366 = vweird.f32 %v1360
    %vm1367 = vmor %vm1365, %vm1366
    %v1368 = vsel %vm1367, %v1360, %v1364
    %v1369 = vand.u32 2147483647, %v1359
    %vm1370 = vcmp.eq.f32.partialorder %v1369, 8.507059e+37
    %v1371 = vand.u32 %v1359, 2147483648
    %v1372 = vor.u32 1.1754944e-38, %v1371
    %v1373 = vsel %vm1370, %v1372, %v1368
    %v1374 = vmul.f32 1.0, %v1373
    %v1375 = vadd.f32 %v1353, %v901
    %1377 = vrot.lane.b32.xlu0 %v1375, 64
    %v1378 = vpop.permute.xlu0 %1377
    %v1380 = vmul.f32 %v1374, %v1378
    %1382 = vrot.lane.b32.xlu0 %v1380, 64
    %v1383 = vpop.permute.xlu0 %1382
    %v1385 = vadd.f32 %v851, %v1383
    %v1386 = vtanh.pop %v1385
    %v1387 = vsub.f32 1.0, %v1374
    %1389 = vrot.lane.b32.xlu0 %v1386, 96
    %v1390 = vpop.permute.xlu0 %1389
    %v1392 = vmul.f32 %v1387, %v1390
    %v1393 = vmul.f32 %v1374, %v1327
    %v1394 = vadd.f32 %v1392, %v1393
    %1396 = vrot.lane.b32.xlu0 %v1394, 96
    %v1397 = vpop.permute.xlu0 %1396
    %1399 = vst.msk [vmem:[#allocation2 + $0x38] sm:$0xff] %vm222, %v1397
    %s1400 = scalar_lea.vmem [#allocation15], 8
    %1401 = vst.msk [vmem:[%s1400] sm:$0xff] %vm222, %v1397
    %v1402 = vld [vmem:[#allocation2] sm:$0xff]
    %v1403 = vld [vmem:[#allocation2 + $0x8] sm:$0xff]
    %v1404 = vld [vmem:[#allocation2 + $0x10] sm:$0xff]
    %v1405 = vld [vmem:[#allocation2 + $0x18] sm:$0xff]
    %v1406 = vld [vmem:[#allocation2 + $0x20] sm:$0xff]
    %v1407 = vld [vmem:[#allocation2 + $0x28] sm:$0xff]
    %v1408 = vld [vmem:[#allocation2 + $0x30] sm:$0xff]
    %v1409 = vld [vmem:[#allocation2 + $0x38] sm:$0xff]
    %v1410 = vld [vmem:[#allocation11] sm:$0xff]
    %v1411 = vld [vmem:[#allocation11 + $0x8] sm:$0xff]
    %v1412 = vld [vmem:[#allocation11 + $0x10] sm:$0xff]
    %v1413 = vld [vmem:[#allocation11 + $0x18] sm:$0xff]
    %v1414 = vld [vmem:[#allocation12] sm:$0x1]
    %v1416 = vperm.slane %v1414, 0
    %v1419 = vsel %vm222, %v1402, 0
    %v1422 = vsel %vm222, %v1403, 0
    %v1425 = vsel %vm222, %v1404, 0
    %v1428 = vsel %vm222, %v1405, 0
    %v1431 = vsel %vm222, %v1406, 0
    %v1434 = vsel %vm222, %v1407, 0
    %v1437 = vsel %vm222, %v1408, 0
    %v1440 = vsel %vm222, %v1409, 0
    %1442 = vmatpush.msra.mxu0 0.0
    %1443 = vmatpush.msra.mxu0 0.0
    %1444 = vmatpush.msra.mxu0 0.0
    %1445 = vmatpush.msra.mxu0 0.0
    %1446 = vmatpush.msra.mxu0 0.0
    %1447 = vmatpush.msra.mxu0 0.0
    %1448 = vmatpush.msra.mxu0 0.0
    %1449 = vmatpush.msra.mxu0 0.0
    %1450 = vmatpush.msra.mxu0 0.0
    %1451 = vmatpush.msra.mxu0 0.0
    %1452 = vmatpush.msra.mxu0 0.0
    %1453 = vmatpush.msra.mxu0 0.0
    %1454 = vmatpush.msra.mxu0 %v1413
    %1455 = vmatpush.msra.mxu0 %v1412
    %1456 = vmatpush.msra.mxu0 %v1411
    %1457 = vmatpush.msra.mxu0 %v1410
    %1458 = vmatmul.f32.gmra.mxu0 %v1419
    %v1459 = vpop.f32.mrf.mxu0
    %v1460 = vadd.f32 %v1416, %v1459
    %1461 = vmatmul.f32.gmra.mxu0 %v1422
    %v1462 = vpop.f32.mrf.mxu0
    %v1463 = vadd.f32 %v1416, %v1462
    %1464 = vmatmul.f32.gmra.mxu0 %v1425
    %v1465 = vpop.f32.mrf.mxu0
    %v1466 = vadd.f32 %v1416, %v1465
    %1467 = vmatmul.f32.gmra.mxu0 %v1428
    %v1468 = vpop.f32.mrf.mxu0
    %v1469 = vadd.f32 %v1416, %v1468
    %1470 = vmatmul.f32.gmra.mxu0 %v1431
    %v1471 = vpop.f32.mrf.mxu0
    %v1472 = vadd.f32 %v1416, %v1471
    %1473 = vmatmul.f32.gmra.mxu0 %v1434
    %v1474 = vpop.f32.mrf.mxu0
    %v1475 = vadd.f32 %v1416, %v1474
    %1476 = vmatmul.f32.gmra.mxu0 %v1437
    %v1477 = vpop.f32.mrf.mxu0
    %v1478 = vadd.f32 %v1416, %v1477
    %1479 = vmatmul.f32.gmra.mxu0 %v1440
    %v1480 = vpop.f32.mrf.mxu0
    %v1481 = vadd.f32 %v1416, %v1480
    %1482 = vdwg.mxu0
    %1483 = vst [vmem:[#allocation14] sm:$0xff] %v1460
    %1484 = vst [vmem:[#allocation14 + $0x8] sm:$0xff] %v1463
    %1485 = vst [vmem:[#allocation14 + $0x10] sm:$0xff] %v1466
    %1486 = vst [vmem:[#allocation14 + $0x18] sm:$0xff] %v1469
    %1487 = vst [vmem:[#allocation14 + $0x20] sm:$0xff] %v1472
    %1488 = vst [vmem:[#allocation14 + $0x28] sm:$0xff] %v1475
    %1489 = vst [vmem:[#allocation14 + $0x30] sm:$0xff] %v1478
    %1490 = vst [vmem:[#allocation14 + $0x38] sm:$0xff] %v1481
    // Predicated region
    $region74: #{tpu_custom_call.1} parent=1 // pred_check
      _
    $region75: #{tpu_custom_call.1} parent=1 // pred_check_branch
      %1492 = sbr.rel (0) target = $region77
    $region76: #{tpu_custom_call.1} parent=1 // pred_region
      %1494 = vsyncadd [#allocation5], 0
      %s1495 = sshll.u32 [#allocation14], 4
      %s1496 = int_to_ptr.vmem [resolvable:$true] %s1495
      %s1497 = sshll.u32 %s12, 4
      %s1498 = int_to_ptr.hbm [resolvable:$true] %s1497
      %1503 = dma.vmem_to_hbm [thread:$0]  %s1496, 1024, %s1498, [#allocation5], 128, 128, 8
    $region77: #{tpu_custom_call.1} parent=1 // pred_fallthru
      _
    // Predicated region
    $region78: #{tpu_custom_call.1} parent=1 // pred_check
      _
    $region79: #{tpu_custom_call.1} parent=1 // pred_check_branch
      %1505 = sbr.rel (0) target = $region81
    $region80: #{tpu_custom_call.1} parent=1 // pred_region
      %1507 = vsyncadd [#allocation16], 0
      %s1508 = sshll.u32 [#allocation15], 4
      %s1509 = int_to_ptr.vmem [resolvable:$true] %s1508
      %s1510 = sshll.u32 %s13, 4
      %s1511 = int_to_ptr.hbm [resolvable:$true] %s1510
      %1516 = dma.vmem_to_hbm [thread:$0]  %s1509, 256, %s1511, [#allocation16], 128, 128, 8
    $region81: #{tpu_custom_call.1} parent=1 // pred_fallthru
      _
    // Predicated region
    $region82: #{tpu_custom_call.1} parent=1 // pred_check
      _
    $region83: #{tpu_custom_call.1} parent=1 // pred_check_branch
      %1518 = sbr.rel (0) target = $region85
    $region84: #{tpu_custom_call.1} parent=1 // pred_region
      %1520 = dma.done [#allocation5], 1024
    $region85: #{tpu_custom_call.1} parent=1 // pred_fallthru
      _
    // Predicated region
    $region86: #{tpu_custom_call.1} parent=1 // pred_check
      _
    $region87: #{tpu_custom_call.1} parent=1 // pred_check_branch
      %1522 = sbr.rel (0) target = $region89
    $region88: #{tpu_custom_call.1} parent=1 // pred_region
      %1524 = dma.done [#allocation16], 256
    $region89: #{tpu_custom_call.1} parent=1 // pred_fallthru
      _
    %1525 = vsyncpa [#allocation4], 1
    %1526 = vsyncpa [#allocation7], 1
    %1527 = vsyncpa [#allocation10], 1
    %1528 = vsyncpa [#allocation13], 1
    %1529 = vsyncpa [#allocation5], 1
    %1530 = vsyncpa [#allocation16], 1

</llo_original>
